<compile_context>
chip_gen: v7x
topology: tpu7x:2x2x1
jax: 0.10.0
libtpu: 0.0.40
codegen_flags: <defaults>
</compile_context>

<pallas_src>
import math

import jax
import jax.numpy as jnp
from jax.experimental import pallas as pl
from jax.experimental.pallas import tpu as pltpu


# -----------------------------------------------------------------------------
# Generation-aware tuning knobs.
# -----------------------------------------------------------------------------
def _device_kind():
    try:
        return jax.devices()[0].device_kind.lower()
    except Exception:
        return ""


def _vmem_limit_bytes():
    # v7x: 64 MiB physical VMEM (32 MiB default scoped); v5e/v6e: 128 MiB.
    return (40 if "v7" in _device_kind() else 64) * 1024 * 1024


def _attention_target_m():
    # v5e MXU is 128 wide with a single store slot -> keep M modest there;
    # v6e/v7x MXU is 256 wide and K (=W, D) is small, so grow M instead.
    return 256 if "v5" in _device_kind() else 512


def _choose_batch_block(B, C, H, target_m):
    """Batch elements per attention grid step: fill the MXU (M = Bblk*C*H ~=
    target_m) while keeping >= 2 grid steps (pipelining / both v7x TCs).
    Returns (Bblk, nsteps); the wrapper pads B up to Bblk*nsteps."""
    per = C * H
    bblk = max(1, min(B, -(-target_m // per)))
    if B >= 2:
        bblk = min(bblk, -(-B // 2))      # keep at least two grid steps
    nsteps = -(-B // bblk)
    return bblk, nsteps


def _spatial_tile_cap(C, HID, vmem_limit):
    """Cap for the MLP spatial tile so the double-buffered x/attn/out blocks
    plus the f32 hidden activation fit comfortably in half the VMEM budget."""
    per_col = 2 * (4 * C + 2 * C + 4 * C) + 4 * HID
    cap = (vmem_limit // 2) // max(per_col, 1)
    return int(max(128, min(4096, cap)))


def _pick_spatial_tile(n, cap):
    """Largest divisor of n that is <= cap, preferring multiples of 128 (lane-dense)."""
    fallback = None
    for t in range(min(n, cap), 0, -1):
        if n % t == 0:
            if t % 128 == 0:
                return t
            if fallback is None:
                fallback = t
    return fallback if fallback is not None else n


# -----------------------------------------------------------------------------
# Kernel 1: additive attention.  Grid over batch blocks; x is consumed as the
# flat (B*C*H, W) token matrix (nn.Linear acts on the last axis W == in_dims).
# Matmuls use bf16 operands with f32 accumulation; the per-batch C-axis
# reduction is done as batched (Bblk, C, H, D) register math (no scratch, no
# unroll).  Output is written in the module's natural (B, C*H, token_dim)
# order as bf16 (the handoff to kernel 2).
# -----------------------------------------------------------------------------
def _make_attention_call(B, C, H, W, D, T, Bblk, vmem_limit):
    eps = 1e-12
    Mb = C * H                 # rows per batch element
    M = Bblk * Mb              # rows per grid step (MXU M dimension)
    assert B % Bblk == 0
    nsteps = B // Bblk

    def kernel(x_ref, wq_ref, bq_ref, wk_ref, bk_ref, wg_ref,
               wp_ref, bp_ref, wf_ref, bf_ref, o_ref):
        xm = x_ref[...].astype(jnp.bfloat16)                        # (M, W)

        q = jnp.dot(xm, wq_ref[...], preferred_element_type=jnp.float32) + bq_ref[...]
        k = jnp.dot(xm, wk_ref[...], preferred_element_type=jnp.float32) + bk_ref[...]

        # F.normalize(dim=-1): one rsqrt (EUP) instead of sqrt + divide.
        q = q * jax.lax.rsqrt(
            jnp.maximum(jnp.sum(q * q, axis=-1, keepdims=True), eps * eps))
        k = k * jax.lax.rsqrt(
            jnp.maximum(jnp.sum(k * k, axis=-1, keepdims=True), eps * eps))

        # Batched additive-attention reduction over the C axis (axis=1): the
        # w_g dot is a lane (XLU) reduce, the C reduces are pure cross-tile
        # VPU adds; intermediates stay in registers.
        q4 = q.reshape(Bblk, C, H, D)
        k4 = k.reshape(Bblk, C, H, D)
        wg = wg_ref[...][None, None]                                # (1,1,1,D)
        qw = jnp.sum(q4 * wg, axis=-1, keepdims=True)               # (Bblk,C,H,1)
        # NOTE: the module's `* scale_factor` is dropped: A is immediately
        # L2-normalized over the C axis, so a positive constant cancels.
        A = qw * jax.lax.rsqrt(
            jnp.maximum(jnp.sum(qw * qw, axis=1, keepdims=True), eps * eps))
        G = jnp.sum(A * q4, axis=1, keepdims=True)                  # (Bblk,1,H,D)
        gk = (G * k4).reshape(M, D).astype(jnp.bfloat16)            # (M, D)

        proj = (jnp.dot(gk, wp_ref[...], preferred_element_type=jnp.float32)
                + bp_ref[...] + q)
        out = (jnp.dot(proj.astype(jnp.bfloat16), wf_ref[...],
                       preferred_element_type=jnp.float32) + bf_ref[...])
        o_ref[...] = out.astype(o_ref.dtype)                        # (M, T)

    def full2d(shape):
        return pl.BlockSpec(shape, lambda i: (0, 0))

    grid_spec = pltpu.PrefetchScalarGridSpec(
        num_scalar_prefetch=0,
        grid=(nsteps,),
        in_specs=[
            pl.BlockSpec((M, W), lambda i: (i, 0)),                 # x tokens
            full2d((W, D)), full2d((1, D)),                         # to_query (bf16 W, f32 b)
            full2d((W, D)), full2d((1, D)),                         # to_key
            full2d((1, D)),                                         # w_g (row)
            full2d((D, D)), full2d((1, D)),                         # Proj
            full2d((D, T)), full2d((1, T)),                         # final
        ],
        out_specs=pl.BlockSpec((M, T), lambda i: (i, 0)),
    )
    return pl.pallas_call(
        kernel,
        out_shape=jax.ShapeDtypeStruct((B * Mb, T), jnp.bfloat16),
        grid_spec=grid_spec,
        compiler_params=pltpu.CompilerParams(
            dimension_semantics=("parallel",),
            vmem_limit_bytes=vmem_limit,
        ),
    )


# -----------------------------------------------------------------------------
# Kernel 2: layer-scale residuals + Mlp (BN eval + 1x1 conv + GELU + 1x1 conv),
# channels-first (NCHW) layout: blocks are (C, spatial_tile) with the spatial
# tile on the lane axis, so loads/stores and the matmul N dim are lane-dense.
# The attention output is read in its natural channels-last order and
# transposed in-kernel (small (tile, C) -> (C, tile)).  The BatchNorm eval
# scale is pre-folded into the fc1 weight by the wrapper.
# -----------------------------------------------------------------------------
def _make_mlp_call(B, C, HW, HID, tile, vmem_limit):
    ntile = HW // tile

    def kernel(x_ref, a_ref, ls1_ref, ls2_ref, w1_ref, b1_ref, w2_ref, b2_ref,
               o_ref):
        a_cf = a_ref[...].astype(jnp.float32).T                     # (C, tile)
        x1 = x_ref[...] + ls1_ref[...] * a_cf                       # x + ls1 * attn
        h = x1.astype(jnp.bfloat16)                                 # BN scale folded into w1
        z = (jnp.dot(w1_ref[...], h,
                     preferred_element_type=jnp.float32) + b1_ref[...])
        # TODO(synk): tanh-GELU (EUP) instead of nn.GELU's exact erf; max abs
        # deviation ~1e-3 pre-layer-scale, negligible after layer_scale_2.
        z = jax.nn.gelu(z, approximate=True)
        y = (jnp.dot(w2_ref[...], z.astype(jnp.bfloat16),
                     preferred_element_type=jnp.float32) + b2_ref[...])
        o_ref[...] = x1 + ls2_ref[...] * y                          # + ls2 * mlp(x1)

    def full2d(shape):
        return pl.BlockSpec(shape, lambda b, j: (0, 0))

    grid_spec = pltpu.PrefetchScalarGridSpec(
        num_scalar_prefetch=0,
        grid=(B, ntile),
        in_specs=[
            pl.BlockSpec((None, C, tile), lambda b, j: (b, 0, j)),  # x (B, C, H*W)
            pl.BlockSpec((None, tile, C), lambda b, j: (b, j, 0)),  # attn (B, H*W, C)
            full2d((C, 1)), full2d((C, 1)),                         # layer scales
            full2d((HID, C)), full2d((HID, 1)),                     # fc1^T * bn_scale, fc1 bias
            full2d((C, HID)), full2d((C, 1)),                       # fc2^T, fc2 bias
        ],
        out_specs=pl.BlockSpec((None, C, tile), lambda b, j: (b, 0, j)),
    )
    return pl.pallas_call(
        kernel,
        out_shape=jax.ShapeDtypeStruct((B, C, HW), jnp.float32),
        grid_spec=grid_spec,
        compiler_params=pltpu.CompilerParams(
            dimension_semantics=("parallel", "parallel"),
            vmem_limit_bytes=vmem_limit,
        ),
    )


# -----------------------------------------------------------------------------
# Wrapper (only free metadata reshapes + tiny weight casts; no XLA transposes
# of activation-sized tensors).
# -----------------------------------------------------------------------------
def efficient_additive_attention_forward(x, p):
    B, C, H, W = x.shape
    D = p["wq"].shape[1]               # token_dim * num_heads
    T = p["wf"].shape[1]               # token_dim
    HID = p["w1"].shape[1]
    assert W == p["wq"].shape[0], "last axis of x must equal in_dims"
    assert T == W, "token_dim must equal W for the module's reshape(B,H,W,C)"

    vmem_limit = _vmem_limit_bytes()
    Bblk, nsteps = _choose_batch_block(B, C, H, target_m=_attention_target_m())
    B_pad = Bblk * nsteps

    # Cast MXU weight operands to bf16 once; biases / scales / w_g stay f32.
    wq = p["wq"].astype(jnp.bfloat16)
    wk = p["wk"].astype(jnp.bfloat16)
    wp = p["wp"].astype(jnp.bfloat16)
    wf = p["wf"].astype(jnp.bfloat16)
    bn_scale = 1.0 / math.sqrt(1.0 + 1e-5)   # BatchNorm2d eval, default stats/affine
    w1t = (p["w1"].T * bn_scale).astype(jnp.bfloat16)   # (HID, C), BN folded in
    w2t = p["w2"].T.astype(jnp.bfloat16)                # (C, HID)

    # Attention in the module's native token layout (flat (B*C*H, W) view: free).
    x_rows = x.reshape(B * C * H, W)
    if B_pad != B:
        # Pad batch so every grid step has a full M block and nsteps >= 2; the
        # padded rows are independent batch elements and are sliced off below.
        x_rows = jnp.pad(x_rows, ((0, (B_pad - B) * C * H), (0, 0)))

    attn = _make_attention_call(B_pad, C, H, W, D, T, Bblk, vmem_limit)(
        x_rows, wq, p["bq"], wk, p["bk"], p["wg"], wp, p["bp"], wf, p["bf"])
    if B_pad != B:
        attn = attn[: B * C * H]

    # PyTorch: out.reshape(B, H, W, C) is a pure reinterpretation of the flat
    # buffer -> free metadata reshape here (permute happens inside kernel 2).
    attn_cl = attn.reshape(B, H * W, C)

    HW = H * W
    tile = _pick_spatial_tile(HW, _spatial_tile_cap(C, HID, vmem_limit))
    if B * (HW // tile) < 2:
        # Keep >= 2 grid steps (dual TensorCore on v7x) when B == 1.
        smaller = _pick_spatial_tile(HW, max(1, tile // 2))
        if 0 < smaller < tile:
            tile = smaller

    y = _make_mlp_call(B, C, HW, HID, tile, vmem_limit)(
        x.reshape(B, C, HW), attn_cl,
        p["ls1"], p["ls2"], w1t, p["b1"], w2t, p["b2"])

    return y.reshape(B, C, H, W)


# -----------------------------------------------------------------------------
# Pure-JAX reference (mirrors the PyTorch forward), f32 / HIGHEST precision.
# -----------------------------------------------------------------------------
def reference_forward(x, p):
    hp = jax.lax.Precision.HIGHEST
    B, C, H, W = x.shape
    T = p["wf"].shape[1]
    eps = 1e-12

    def l2n(v, ax):
        return v / jnp.maximum(jnp.sqrt(jnp.sum(v * v, axis=ax, keepdims=True)), eps)

    q = jnp.einsum("bchw,wd->bchd", x, p["wq"], precision=hp) + p["bq"][0]
    k = jnp.einsum("bchw,wd->bchd", x, p["wk"], precision=hp) + p["bk"][0]
    q = l2n(q, -1)
    k = l2n(k, -1)
    qw = jnp.sum(q * p["wg"][0], axis=-1, keepdims=True)            # (B, C, H, 1)
    A = l2n(qw * (float(T) ** -0.5), 1)
    G = jnp.sum(A * q, axis=1)                                      # (B, H, D)
    G = jnp.broadcast_to(G[:, None], q.shape)
    out = jnp.einsum("bchd,de->bche", G * k, p["wp"], precision=hp) + p["bp"][0] + q
    out = jnp.einsum("bchd,dt->bcht", out, p["wf"], precision=hp) + p["bf"][0]
    out4 = jnp.transpose(out.reshape(B, H, W, C), (0, 3, 1, 2))
    x1 = x + p["ls1"].reshape(1, C, 1, 1) * out4
    h = x1 / jnp.sqrt(1.0 + 1e-5)
    h = (jnp.einsum("bchw,ce->behw", h, p["w1"], precision=hp)
         + p["b1"].reshape(1, -1, 1, 1))
    h = jax.nn.gelu(h, approximate=False)
    y = (jnp.einsum("behw,ec->bchw", h, p["w2"], precision=hp)
         + p["b2"].reshape(1, -1, 1, 1))
    return x1 + p["ls2"].reshape(1, C, 1, 1) * y


if __name__ == "__main__":
    # Small shapes consistent with the forward's constraints:
    #   W == in_dims (Linear on last axis) and token_dim == W (reshape(B,H,W,C)).
    B, C, H = 4, 8, 8
    token_dim, num_heads = 64, 2
    in_dims = token_dim
    W = in_dims
    D = token_dim * num_heads
    dim = C
    hidden = int(dim * 4.0)

    key = jax.random.PRNGKey(0)
    ks = jax.random.split(key, 14)
    p = dict(
        wq=0.02 * jax.random.normal(ks[0], (in_dims, D), jnp.float32),
        bq=0.02 * jax.random.normal(ks[1], (1, D), jnp.float32),
        wk=0.02 * jax.random.normal(ks[2], (in_dims, D), jnp.float32),
        bk=0.02 * jax.random.normal(ks[3], (1, D), jnp.float32),
        wg=jax.random.normal(ks[4], (1, D), jnp.float32),            # torch.randn(D,1) as a row
        wp=0.02 * jax.random.normal(ks[5], (D, D), jnp.float32),
        bp=0.02 * jax.random.normal(ks[6], (1, D), jnp.float32),
        wf=0.02 * jax.random.normal(ks[7], (D, token_dim), jnp.float32),
        bf=0.02 * jax.random.normal(ks[8], (1, token_dim), jnp.float32),
        ls1=jnp.full((C, 1), 1e-5, jnp.float32),                     # layer_scale_1
        ls2=jnp.full((C, 1), 1e-5, jnp.float32),                     # layer_scale_2
        w1=0.02 * jax.random.normal(ks[9], (dim, hidden), jnp.float32),   # Mlp.fc1 (1x1 conv)
        b1=0.01 * jax.random.normal(ks[10], (hidden, 1), jnp.float32),
        w2=0.02 * jax.random.normal(ks[11], (hidden, dim), jnp.float32),  # Mlp.fc2 (1x1 conv)
        b2=0.01 * jax.random.normal(ks[12], (dim, 1), jnp.float32),
    )

    x = jax.random.normal(ks[13], (B, C, H, W), jnp.float32)

    out = jax.block_until_ready(efficient_additive_attention_forward(x, p))
    ref = jax.block_until_ready(reference_forward(x, p))

    assert out.shape == x.shape, (out.shape, x.shape)
    err = float(jnp.max(jnp.abs(out - ref)))
    assert err < 1e-3, f"max abs err vs reference: {err}"
    print("KERNEL_OK")
</pallas_src>

<mosaic_0001>
module attributes {stable_mosaic.version = 11 : i64} {
  func.func @kernel(%arg0: i32, %arg1: memref<128x64xf32, #tpu.memory_space<vmem>>, %arg2: memref<64x128xbf16, #tpu.memory_space<vmem>>, %arg3: memref<1x128xf32, #tpu.memory_space<vmem>>, %arg4: memref<64x128xbf16, #tpu.memory_space<vmem>>, %arg5: memref<1x128xf32, #tpu.memory_space<vmem>>, %arg6: memref<1x128xf32, #tpu.memory_space<vmem>>, %arg7: memref<128x128xbf16, #tpu.memory_space<vmem>>, %arg8: memref<1x128xf32, #tpu.memory_space<vmem>>, %arg9: memref<128x64xbf16, #tpu.memory_space<vmem>>, %arg10: memref<1x64xf32, #tpu.memory_space<vmem>>, %arg11: memref<128x64xbf16, #tpu.memory_space<vmem>>) attributes {dimension_semantics = [#tpu.dimension_semantics<parallel>], iteration_bounds = array<i64: 2>, scalar_prefetch = 0 : i64, scratch_operands = 0 : i64, tpu.core_type = #tpu.core_type<tc>, window_params = [{transform_indices = @transform_0, window_bounds = array<i64: 128, 64>}, {pipeline_mode = #tpu.pipeline_mode<synchronous>, transform_indices = @transform_1, window_bounds = array<i64: 64, 128>}, {pipeline_mode = #tpu.pipeline_mode<synchronous>, transform_indices = @transform_2, window_bounds = array<i64: 1, 128>}, {pipeline_mode = #tpu.pipeline_mode<synchronous>, transform_indices = @transform_3, window_bounds = array<i64: 64, 128>}, {pipeline_mode = #tpu.pipeline_mode<synchronous>, transform_indices = @transform_4, window_bounds = array<i64: 1, 128>}, {pipeline_mode = #tpu.pipeline_mode<synchronous>, transform_indices = @transform_5, window_bounds = array<i64: 1, 128>}, {pipeline_mode = #tpu.pipeline_mode<synchronous>, transform_indices = @transform_6, window_bounds = array<i64: 128, 128>}, {pipeline_mode = #tpu.pipeline_mode<synchronous>, transform_indices = @transform_7, window_bounds = array<i64: 1, 128>}, {pipeline_mode = #tpu.pipeline_mode<synchronous>, transform_indices = @transform_8, window_bounds = array<i64: 128, 64>}, {pipeline_mode = #tpu.pipeline_mode<synchronous>, transform_indices = @transform_9, window_bounds = array<i64: 1, 64>}, {transform_indices = @transform_10, window_bounds = array<i64: 128, 64>}]} {
    %c0 = arith.constant 0 : index
    %c0_0 = arith.constant 0 : index
    %0 = vector.load %arg1[%c0, %c0_0] : memref<128x64xf32, #tpu.memory_space<vmem>>, vector<128x64xf32>
    %1 = arith.truncf %0 : vector<128x64xf32> to vector<128x64xbf16>
    %c0_1 = arith.constant 0 : index
    %c0_2 = arith.constant 0 : index
    %2 = vector.load %arg2[%c0_1, %c0_2] : memref<64x128xbf16, #tpu.memory_space<vmem>>, vector<64x128xbf16>
    %cst = arith.constant dense<0.000000e+00> : vector<128x128xf32>
    %3 = tpu.matmul %1, %2, %cst {dimension_numbers = #tpu.dot_dimension_numbers<[1], [0], [0], [1], [0, 0, 1, 1], [], []>} : vector<128x64xbf16>, vector<64x128xbf16>, vector<128x128xf32> -> vector<128x128xf32>
    %c0_3 = arith.constant 0 : index
    %c0_4 = arith.constant 0 : index
    %4 = vector.load %arg3[%c0_3, %c0_4] : memref<1x128xf32, #tpu.memory_space<vmem>>, vector<1x128xf32>
    %5 = vector.broadcast %4 : vector<1x128xf32> to vector<128x128xf32>
    %6 = arith.addf %3, %5 : vector<128x128xf32>
    %c0_5 = arith.constant 0 : index
    %c0_6 = arith.constant 0 : index
    %7 = vector.load %arg4[%c0_5, %c0_6] : memref<64x128xbf16, #tpu.memory_space<vmem>>, vector<64x128xbf16>
    %cst_7 = arith.constant dense<0.000000e+00> : vector<128x128xf32>
    %8 = tpu.matmul %1, %7, %cst_7 {dimension_numbers = #tpu.dot_dimension_numbers<[1], [0], [0], [1], [0, 0, 1, 1], [], []>} : vector<128x64xbf16>, vector<64x128xbf16>, vector<128x128xf32> -> vector<128x128xf32>
    %c0_8 = arith.constant 0 : index
    %c0_9 = arith.constant 0 : index
    %9 = vector.load %arg5[%c0_8, %c0_9] : memref<1x128xf32, #tpu.memory_space<vmem>>, vector<1x128xf32>
    %10 = vector.broadcast %9 : vector<1x128xf32> to vector<128x128xf32>
    %11 = arith.addf %8, %10 : vector<128x128xf32>
    %12 = arith.mulf %6, %6 : vector<128x128xf32>
    %cst_10 = arith.constant dense<0.000000e+00> : vector<128xf32>
    %13 = vector.multi_reduction <add>, %12, %cst_10 [1] : vector<128x128xf32> to vector<128xf32>
    %14 = vector.shape_cast %13 : vector<128xf32> to vector<128x1xf32>
    %cst_11 = arith.constant 1.000000e-24 : f32
    %15 = vector.broadcast %cst_11 : f32 to vector<128x1xf32>
    %16 = arith.maximumf %14, %15 : vector<128x1xf32>
    %17 = math.rsqrt %16 : vector<128x1xf32>
    %18 = vector.broadcast %17 : vector<128x1xf32> to vector<128x128xf32>
    %19 = arith.mulf %6, %18 : vector<128x128xf32>
    %20 = arith.mulf %11, %11 : vector<128x128xf32>
    %cst_12 = arith.constant dense<0.000000e+00> : vector<128xf32>
    %21 = vector.multi_reduction <add>, %20, %cst_12 [1] : vector<128x128xf32> to vector<128xf32>
    %22 = vector.shape_cast %21 : vector<128xf32> to vector<128x1xf32>
    %cst_13 = arith.constant 1.000000e-24 : f32
    %23 = vector.broadcast %cst_13 : f32 to vector<128x1xf32>
    %24 = arith.maximumf %22, %23 : vector<128x1xf32>
    %25 = math.rsqrt %24 : vector<128x1xf32>
    %26 = vector.broadcast %25 : vector<128x1xf32> to vector<128x128xf32>
    %27 = arith.mulf %11, %26 : vector<128x128xf32>
    %28 = vector.shape_cast %19 : vector<128x128xf32> to vector<2x8x8x128xf32>
    %29 = vector.shape_cast %27 : vector<128x128xf32> to vector<2x8x8x128xf32>
    %c0_14 = arith.constant 0 : index
    %c0_15 = arith.constant 0 : index
    %30 = vector.load %arg6[%c0_14, %c0_15] : memref<1x128xf32, #tpu.memory_space<vmem>>, vector<1x128xf32>
    %31 = vector.shape_cast %30 : vector<1x128xf32> to vector<1x1x1x128xf32>
    %32 = vector.broadcast %31 : vector<1x1x1x128xf32> to vector<2x8x8x128xf32>
    %33 = arith.mulf %28, %32 : vector<2x8x8x128xf32>
    %cst_16 = arith.constant dense<0.000000e+00> : vector<2x8x8xf32>
    %34 = vector.multi_reduction <add>, %33, %cst_16 [3] : vector<2x8x8x128xf32> to vector<2x8x8xf32>
    %35 = vector.shape_cast %34 : vector<2x8x8xf32> to vector<2x8x8x1xf32>
    %36 = arith.mulf %35, %35 : vector<2x8x8x1xf32>
    %cst_17 = arith.constant dense<0.000000e+00> : vector<2x8x1xf32>
    %37 = vector.multi_reduction <add>, %36, %cst_17 [1] : vector<2x8x8x1xf32> to vector<2x8x1xf32>
    %38 = vector.shape_cast %37 : vector<2x8x1xf32> to vector<2x1x8x1xf32>
    %cst_18 = arith.constant 1.000000e-24 : f32
    %39 = vector.broadcast %cst_18 : f32 to vector<2x1x8x1xf32>
    %40 = arith.maximumf %38, %39 : vector<2x1x8x1xf32>
    %41 = math.rsqrt %40 : vector<2x1x8x1xf32>
    %42 = vector.broadcast %41 : vector<2x1x8x1xf32> to vector<2x8x8x1xf32>
    %43 = arith.mulf %35, %42 : vector<2x8x8x1xf32>
    %44 = vector.broadcast %43 : vector<2x8x8x1xf32> to vector<2x8x8x128xf32>
    %45 = arith.mulf %44, %28 : vector<2x8x8x128xf32>
    %cst_19 = arith.constant dense<0.000000e+00> : vector<2x8x128xf32>
    %46 = vector.multi_reduction <add>, %45, %cst_19 [1] : vector<2x8x8x128xf32> to vector<2x8x128xf32>
    %47 = vector.shape_cast %46 : vector<2x8x128xf32> to vector<2x1x8x128xf32>
    %48 = vector.broadcast %47 : vector<2x1x8x128xf32> to vector<2x8x8x128xf32>
    %49 = arith.mulf %48, %29 : vector<2x8x8x128xf32>
    %50 = vector.shape_cast %49 : vector<2x8x8x128xf32> to vector<128x128xf32>
    %51 = arith.truncf %50 : vector<128x128xf32> to vector<128x128xbf16>
    %c0_20 = arith.constant 0 : index
    %c0_21 = arith.constant 0 : index
    %52 = vector.load %arg7[%c0_20, %c0_21] : memref<128x128xbf16, #tpu.memory_space<vmem>>, vector<128x128xbf16>
    %cst_22 = arith.constant dense<0.000000e+00> : vector<128x128xf32>
    %53 = tpu.matmul %51, %52, %cst_22 {dimension_numbers = #tpu.dot_dimension_numbers<[1], [0], [0], [1], [0, 0, 1, 1], [], []>} : vector<128x128xbf16>, vector<128x128xbf16>, vector<128x128xf32> -> vector<128x128xf32>
    %c0_23 = arith.constant 0 : index
    %c0_24 = arith.constant 0 : index
    %54 = vector.load %arg8[%c0_23, %c0_24] : memref<1x128xf32, #tpu.memory_space<vmem>>, vector<1x128xf32>
    %55 = vector.broadcast %54 : vector<1x128xf32> to vector<128x128xf32>
    %56 = arith.addf %53, %55 : vector<128x128xf32>
    %57 = arith.addf %56, %19 : vector<128x128xf32>
    %58 = arith.truncf %57 : vector<128x128xf32> to vector<128x128xbf16>
    %c0_25 = arith.constant 0 : index
    %c0_26 = arith.constant 0 : index
    %59 = vector.load %arg9[%c0_25, %c0_26] : memref<128x64xbf16, #tpu.memory_space<vmem>>, vector<128x64xbf16>
    %cst_27 = arith.constant dense<0.000000e+00> : vector<128x64xf32>
    %60 = tpu.matmul %58, %59, %cst_27 {dimension_numbers = #tpu.dot_dimension_numbers<[1], [0], [0], [1], [0, 0, 1, 1], [], []>} : vector<128x128xbf16>, vector<128x64xbf16>, vector<128x64xf32> -> vector<128x64xf32>
    %c0_28 = arith.constant 0 : index
    %c0_29 = arith.constant 0 : index
    %61 = vector.load %arg10[%c0_28, %c0_29] : memref<1x64xf32, #tpu.memory_space<vmem>>, vector<1x64xf32>
    %62 = vector.broadcast %61 : vector<1x64xf32> to vector<128x64xf32>
    %63 = arith.addf %60, %62 : vector<128x64xf32>
    %64 = arith.truncf %63 : vector<128x64xf32> to vector<128x64xbf16>
    %c0_30 = arith.constant 0 : index
    %c0_31 = arith.constant 0 : index
    %65 = vector.load %arg11[%c0_30, %c0_31] : memref<128x64xbf16, #tpu.memory_space<vmem>>, vector<128x64xbf16>
    tpu.vector_store %arg11[%c0_30, %c0_31], %64 {strides = array<i32>} : memref<128x64xbf16, #tpu.memory_space<vmem>>, vector<128x64xbf16>,
    return
  }
  func.func @transform_0(%arg0: i32) -> (i32, i32) {
    %c0_i32 = arith.constant 0 : i32
    %c0_i32_0 = arith.constant 0 : i32
    return %arg0, %c0_i32 : i32, i32
  }
  func.func @transform_1(%arg0: i32) -> (i32, i32) {
    %c0_i32 = arith.constant 0 : i32
    %c0_i32_0 = arith.constant 0 : i32
    %c0_i32_1 = arith.constant 0 : i32
    return %c0_i32, %c0_i32_0 : i32, i32
  }
  func.func @transform_2(%arg0: i32) -> (i32, i32) {
    %c0_i32 = arith.constant 0 : i32
    %c0_i32_0 = arith.constant 0 : i32
    %c0_i32_1 = arith.constant 0 : i32
    return %c0_i32, %c0_i32_0 : i32, i32
  }
  func.func @transform_3(%arg0: i32) -> (i32, i32) {
    %c0_i32 = arith.constant 0 : i32
    %c0_i32_0 = arith.constant 0 : i32
    %c0_i32_1 = arith.constant 0 : i32
    return %c0_i32, %c0_i32_0 : i32, i32
  }
  func.func @transform_4(%arg0: i32) -> (i32, i32) {
    %c0_i32 = arith.constant 0 : i32
    %c0_i32_0 = arith.constant 0 : i32
    %c0_i32_1 = arith.constant 0 : i32
    return %c0_i32, %c0_i32_0 : i32, i32
  }
  func.func @transform_5(%arg0: i32) -> (i32, i32) {
    %c0_i32 = arith.constant 0 : i32
    %c0_i32_0 = arith.constant 0 : i32
    %c0_i32_1 = arith.constant 0 : i32
    return %c0_i32, %c0_i32_0 : i32, i32
  }
  func.func @transform_6(%arg0: i32) -> (i32, i32) {
    %c0_i32 = arith.constant 0 : i32
    %c0_i32_0 = arith.constant 0 : i32
    %c0_i32_1 = arith.constant 0 : i32
    return %c0_i32, %c0_i32_0 : i32, i32
  }
  func.func @transform_7(%arg0: i32) -> (i32, i32) {
    %c0_i32 = arith.constant 0 : i32
    %c0_i32_0 = arith.constant 0 : i32
    %c0_i32_1 = arith.constant 0 : i32
    return %c0_i32, %c0_i32_0 : i32, i32
  }
  func.func @transform_8(%arg0: i32) -> (i32, i32) {
    %c0_i32 = arith.constant 0 : i32
    %c0_i32_0 = arith.constant 0 : i32
    %c0_i32_1 = arith.constant 0 : i32
    return %c0_i32, %c0_i32_0 : i32, i32
  }
  func.func @transform_9(%arg0: i32) -> (i32, i32) {
    %c0_i32 = arith.constant 0 : i32
    %c0_i32_0 = arith.constant 0 : i32
    %c0_i32_1 = arith.constant 0 : i32
    return %c0_i32, %c0_i32_0 : i32, i32
  }
  func.func @transform_10(%arg0: i32) -> (i32, i32) {
    %c0_i32 = arith.constant 0 : i32
    %c0_i32_0 = arith.constant 0 : i32
    return %arg0, %c0_i32 : i32, i32
  }
}

</mosaic_0001>

<llo_original>
// kernel: tpu_custom_call.1
$region0: #{tpu_custom_call.1}
  #allocation0 [shape = 'u32[]', space=smem, size = 0x4, offset = 0x4, fixed_abs, tag = 'smem constant byte address 0x4 - core index']
  #allocation1 [shape = 'u32[144,128]{1,0:T(1,128)}', space=vmem, size = 0x12000, scoped, tag = 'internal scratch']
  %s0 = inlined_call_operand.hbm [shape: f32[256,64], index: 0, kind: input, shape index: {}]
  %s1 = inlined_call_operand.hbm [shape: bf16[64,128], index: 1, kind: input, shape index: {}]
  %s2 = inlined_call_operand.hbm [shape: f32[1,128], index: 2, kind: input, shape index: {}]
  %s3 = inlined_call_operand.hbm [shape: bf16[64,128], index: 3, kind: input, shape index: {}]
  %s4 = inlined_call_operand.hbm [shape: f32[1,128], index: 4, kind: input, shape index: {}]
  %s5 = inlined_call_operand.hbm [shape: f32[1,128], index: 5, kind: input, shape index: {}]
  %s6 = inlined_call_operand.hbm [shape: bf16[128,128], index: 6, kind: input, shape index: {}]
  %s7 = inlined_call_operand.hbm [shape: f32[1,128], index: 7, kind: input, shape index: {}]
  %s8 = inlined_call_operand.hbm [shape: bf16[128,64], index: 8, kind: input, shape index: {}]
  %s9 = inlined_call_operand.hbm [shape: f32[1,64], index: 9, kind: input, shape index: {}]
  %s10 = inlined_call_operand.hbm [shape: bf16[256,64], index: 10, kind: output, shape index: {}]
  %s11 = sld [smem:[#allocation0]]
  $region113: #{tpu_custom_call.1} parent=0
    _
  %s13 = ssub.s32 1, %s11
  %s14 = scalar_select 0, %s13, %s11
  $region1: #{tpu_custom_call.1} parent=0
    #allocation2 [shape = 'u8[131072]{0}', space=vmem, size = 0x20000, scoped, tag = 'input window, operand 0']
    #allocation3 [shape = 's32[2]{0}', space=sflag, size = 0x8, scoped, tag = 'scoped memory for tpu_custom_call.1']
    #allocation4 [shape = 's32[2]{0}', space=sflag, size = 0x8, scoped, tag = 'scoped memory for tpu_custom_call.1']
    #allocation5 [shape = 'u8[16384]{0}', space=vmem, size = 0x4000, scoped, tag = 'input window, operand 1, single buffered']
    #allocation6 [shape = 's32[1]{0}', space=sflag, size = 0x4, scoped, tag = 'scoped memory for tpu_custom_call.1']
    #allocation7 [shape = 'u8[512]{0}', space=vmem, size = 0x400, scoped, tag = 'input window, operand 2, single buffered']
    #allocation8 [shape = 'u8[16384]{0}', space=vmem, size = 0x4000, scoped, tag = 'input window, operand 3, single buffered']
    #allocation9 [shape = 's32[1]{0}', space=sflag, size = 0x4, scoped, tag = 'scoped memory for tpu_custom_call.1']
    #allocation10 [shape = 'u8[512]{0}', space=vmem, size = 0x400, scoped, tag = 'input window, operand 4, single buffered']
    #allocation11 [shape = 'u8[512]{0}', space=vmem, size = 0x400, scoped, tag = 'input window, operand 5, single buffered']
    #allocation12 [shape = 's32[1]{0}', space=sflag, size = 0x4, scoped, tag = 'scoped memory for tpu_custom_call.1']
    #allocation13 [shape = 'u8[32768]{0}', space=vmem, size = 0x8000, scoped, tag = 'input window, operand 6, single buffered']
    #allocation14 [shape = 'u8[512]{0}', space=vmem, size = 0x400, scoped, tag = 'input window, operand 7, single buffered']
    #allocation15 [shape = 's32[1]{0}', space=sflag, size = 0x4, scoped, tag = 'scoped memory for tpu_custom_call.1']
    #allocation16 [shape = 'u8[32768]{0}', space=vmem, size = 0x8000, scoped, tag = 'input window, operand 8, single buffered']
    #allocation17 [shape = 'u8[512]{0}', space=vmem, size = 0x400, scoped, tag = 'input window, operand 9, single buffered']
    #allocation18 [shape = 's32[1]{0}', space=sflag, size = 0x4, scoped, tag = 'scoped memory for tpu_custom_call.1']
    #allocation19 [shape = 'u8[65536]{0}', space=vmem, size = 0x10000, scoped, tag = 'output window, operand 0']
    %15 = vsyncpa [#allocation3], 0
    %s16 = scalar_lea.sflag [#allocation3], 1
    %17 = vsyncpa %s16, 0
    %18 = vsyncpa [#allocation6], 0
    %19 = vsyncpa [#allocation9], 0
    %20 = vsyncpa [#allocation12], 0
    %21 = vsyncpa [#allocation15], 0
    %22 = vsyncpa [#allocation18], 0
    %23 = vsyncpa [#allocation4], 0
    %s24 = scalar_lea.sflag [#allocation4], 1
    %25 = vsyncpa %s24, 0
    loop: start=0, step=1, limit=4
    $region2: #{tpu_custom_call.1} parent=1 // loop_pre_header
      _
    $region3: #{tpu_custom_call.1} parent=1 // loop_header
      %s27 = sphi 0, %s31
      %p28 = scmp.ge.s32.totalorder %s27, 4
      %s37 = sphi 0, %s39
      %s40 = sphi 0, %s37
      %s41 = sphi 0, %s40
      %s57 = sphi 0, %s41
      %s61 = sphi 0, %s61
      %s63 = sphi 0, %s61
      %s64 = sphi 0, %s63
      %s78 = sphi 0, %s64
      %s82 = sphi 0, %s82
      %s84 = sphi 0, %s82
      %s85 = sphi 0, %s84
      %s99 = sphi 0, %s85
      %s103 = sphi 0, %s103
      %s105 = sphi 0, %s103
      %s106 = sphi 0, %s105
      %s120 = sphi 0, %s106
      %s124 = sphi 0, %s124
      %s126 = sphi 0, %s124
      %s127 = sphi 0, %s126
      %s141 = sphi 0, %s127
      %s145 = sphi 0, %s145
      %s147 = sphi 0, %s145
      %s148 = sphi 0, %s147
      %s162 = sphi 0, %s148
      %s166 = sphi 0, %s166
      %s168 = sphi 0, %s166
      %s169 = sphi 0, %s168
      %s183 = sphi 0, %s169
      %s187 = sphi 0, %s187
      %s189 = sphi 0, %s187
      %s190 = sphi 0, %s189
      %s204 = sphi 0, %s190
      %s208 = sphi 0, %s208
      %s210 = sphi 0, %s208
      %s211 = sphi 0, %s210
      %s225 = sphi 0, %s211
      %s229 = sphi 0, %s229
      %s231 = sphi 0, %s229
      %s232 = sphi 0, %s231
      %s246 = sphi 0, %s232
      %s252 = sphi 0, %s254
      %s255 = sphi 0, %s252
      %s256 = sphi 0, %s255
      %s272 = sphi 0, %s256
    $region4: #{tpu_custom_call.1} parent=1 // loop_header_branch
      %30 = sbr.rel (%p28) target = $region8
    $region5: #{tpu_custom_call.1} parent=1 // loop_body
      %s32 = ssub.s32 %s27, 1
      %s33 = ssub.s32 %s27, 2
      %s34 = sadd.s32 %s27, 1
      %s35 = ssub.s32 %s27, %s34
      %p36 = scmp.eq.s32.totalorder %s35, 0
      %s38 = sadd.s32 %s37, 1
      %s39 = scalar_select %p36, %s37, %s38
      %p42 = pneg %p36
      %p43 = scmp.eq.s32.totalorder %s27, 1
      %p44 = por %p42, %p43
      %p45 = scmp.ne.s32.totalorder %s37, %s40
      %p46 = scmp.eq.s32.totalorder %s27, 0
      %p47 = por %p45, %p46
      %p48 = scmp.ne.s32.totalorder %s37, %s40
      %p49 = scmp.eq.s32.totalorder %s32, 1
      %p50 = por %p48, %p49
      %p51 = scmp.ne.s32.totalorder %s40, %s41
      %p52 = scmp.eq.s32.totalorder %s32, 0
      %p53 = por %p51, %p52
      %p54 = scmp.ne.s32.totalorder %s40, %s41
      %p55 = scmp.eq.s32.totalorder %s33, 1
      %p56 = por %p54, %p55
      %p58 = scmp.ne.s32.totalorder %s41, %s57
      %p59 = scmp.eq.s32.totalorder %s33, 0
      %p60 = por %p58, %p59
      %s62 = sadd.s32 %s61, 1
      %p65 = scmp.eq.s32.totalorder %s27, 1
      %p66 = scmp.ne.s32.totalorder %s61, %s63
      %p67 = scmp.eq.s32.totalorder %s27, 0
      %p68 = por %p66, %p67
      %p69 = scmp.ne.s32.totalorder %s61, %s63
      %p70 = scmp.eq.s32.totalorder %s32, 1
      %p71 = por %p69, %p70
      %p72 = scmp.ne.s32.totalorder %s63, %s64
      %p73 = scmp.eq.s32.totalorder %s32, 0
      %p74 = por %p72, %p73
      %p75 = scmp.ne.s32.totalorder %s63, %s64
      %p76 = scmp.eq.s32.totalorder %s33, 1
      %p77 = por %p75, %p76
      %p79 = scmp.ne.s32.totalorder %s64, %s78
      %p80 = scmp.eq.s32.totalorder %s33, 0
      %p81 = por %p79, %p80
      %s83 = sadd.s32 %s82, 1
      %p86 = scmp.eq.s32.totalorder %s27, 1
      %p87 = scmp.ne.s32.totalorder %s82, %s84
      %p88 = scmp.eq.s32.totalorder %s27, 0
      %p89 = por %p87, %p88
      %p90 = scmp.ne.s32.totalorder %s82, %s84
      %p91 = scmp.eq.s32.totalorder %s32, 1
      %p92 = por %p90, %p91
      %p93 = scmp.ne.s32.totalorder %s84, %s85
      %p94 = scmp.eq.s32.totalorder %s32, 0
      %p95 = por %p93, %p94
      %p96 = scmp.ne.s32.totalorder %s84, %s85
      %p97 = scmp.eq.s32.totalorder %s33, 1
      %p98 = por %p96, %p97
      %p100 = scmp.ne.s32.totalorder %s85, %s99
      %p101 = scmp.eq.s32.totalorder %s33, 0
      %p102 = por %p100, %p101
      %s104 = sadd.s32 %s103, 1
      %p107 = scmp.eq.s32.totalorder %s27, 1
      %p108 = scmp.ne.s32.totalorder %s103, %s105
      %p109 = scmp.eq.s32.totalorder %s27, 0
      %p110 = por %p108, %p109
      %p111 = scmp.ne.s32.totalorder %s103, %s105
      %p112 = scmp.eq.s32.totalorder %s32, 1
      %p113 = por %p111, %p112
      %p114 = scmp.ne.s32.totalorder %s105, %s106
      %p115 = scmp.eq.s32.totalorder %s32, 0
      %p116 = por %p114, %p115
      %p117 = scmp.ne.s32.totalorder %s105, %s106
      %p118 = scmp.eq.s32.totalorder %s33, 1
      %p119 = por %p117, %p118
      %p121 = scmp.ne.s32.totalorder %s106, %s120
      %p122 = scmp.eq.s32.totalorder %s33, 0
      %p123 = por %p121, %p122
      %s125 = sadd.s32 %s124, 1
      %p128 = scmp.eq.s32.totalorder %s27, 1
      %p129 = scmp.ne.s32.totalorder %s124, %s126
      %p130 = scmp.eq.s32.totalorder %s27, 0
      %p131 = por %p129, %p130
      %p132 = scmp.ne.s32.totalorder %s124, %s126
      %p133 = scmp.eq.s32.totalorder %s32, 1
      %p134 = por %p132, %p133
      %p135 = scmp.ne.s32.totalorder %s126, %s127
      %p136 = scmp.eq.s32.totalorder %s32, 0
      %p137 = por %p135, %p136
      %p138 = scmp.ne.s32.totalorder %s126, %s127
      %p139 = scmp.eq.s32.totalorder %s33, 1
      %p140 = por %p138, %p139
      %p142 = scmp.ne.s32.totalorder %s127, %s141
      %p143 = scmp.eq.s32.totalorder %s33, 0
      %p144 = por %p142, %p143
      %s146 = sadd.s32 %s145, 1
      %p149 = scmp.eq.s32.totalorder %s27, 1
      %p150 = scmp.ne.s32.totalorder %s145, %s147
      %p151 = scmp.eq.s32.totalorder %s27, 0
      %p152 = por %p150, %p151
      %p153 = scmp.ne.s32.totalorder %s145, %s147
      %p154 = scmp.eq.s32.totalorder %s32, 1
      %p155 = por %p153, %p154
      %p156 = scmp.ne.s32.totalorder %s147, %s148
      %p157 = scmp.eq.s32.totalorder %s32, 0
      %p158 = por %p156, %p157
      %p159 = scmp.ne.s32.totalorder %s147, %s148
      %p160 = scmp.eq.s32.totalorder %s33, 1
      %p161 = por %p159, %p160
      %p163 = scmp.ne.s32.totalorder %s148, %s162
      %p164 = scmp.eq.s32.totalorder %s33, 0
      %p165 = por %p163, %p164
      %s167 = sadd.s32 %s166, 1
      %p170 = scmp.eq.s32.totalorder %s27, 1
      %p171 = scmp.ne.s32.totalorder %s166, %s168
      %p172 = scmp.eq.s32.totalorder %s27, 0
      %p173 = por %p171, %p172
      %p174 = scmp.ne.s32.totalorder %s166, %s168
      %p175 = scmp.eq.s32.totalorder %s32, 1
      %p176 = por %p174, %p175
      %p177 = scmp.ne.s32.totalorder %s168, %s169
      %p178 = scmp.eq.s32.totalorder %s32, 0
      %p179 = por %p177, %p178
      %p180 = scmp.ne.s32.totalorder %s168, %s169
      %p181 = scmp.eq.s32.totalorder %s33, 1
      %p182 = por %p180, %p181
      %p184 = scmp.ne.s32.totalorder %s169, %s183
      %p185 = scmp.eq.s32.totalorder %s33, 0
      %p186 = por %p184, %p185
      %s188 = sadd.s32 %s187, 1
      %p191 = scmp.eq.s32.totalorder %s27, 1
      %p192 = scmp.ne.s32.totalorder %s187, %s189
      %p193 = scmp.eq.s32.totalorder %s27, 0
      %p194 = por %p192, %p193
      %p195 = scmp.ne.s32.totalorder %s187, %s189
      %p196 = scmp.eq.s32.totalorder %s32, 1
      %p197 = por %p195, %p196
      %p198 = scmp.ne.s32.totalorder %s189, %s190
      %p199 = scmp.eq.s32.totalorder %s32, 0
      %p200 = por %p198, %p199
      %p201 = scmp.ne.s32.totalorder %s189, %s190
      %p202 = scmp.eq.s32.totalorder %s33, 1
      %p203 = por %p201, %p202
      %p205 = scmp.ne.s32.totalorder %s190, %s204
      %p206 = scmp.eq.s32.totalorder %s33, 0
      %p207 = por %p205, %p206
      %s209 = sadd.s32 %s208, 1
      %p212 = scmp.eq.s32.totalorder %s27, 1
      %p213 = scmp.ne.s32.totalorder %s208, %s210
      %p214 = scmp.eq.s32.totalorder %s27, 0
      %p215 = por %p213, %p214
      %p216 = scmp.ne.s32.totalorder %s208, %s210
      %p217 = scmp.eq.s32.totalorder %s32, 1
      %p218 = por %p216, %p217
      %p219 = scmp.ne.s32.totalorder %s210, %s211
      %p220 = scmp.eq.s32.totalorder %s32, 0
      %p221 = por %p219, %p220
      %p222 = scmp.ne.s32.totalorder %s210, %s211
      %p223 = scmp.eq.s32.totalorder %s33, 1
      %p224 = por %p222, %p223
      %p226 = scmp.ne.s32.totalorder %s211, %s225
      %p227 = scmp.eq.s32.totalorder %s33, 0
      %p228 = por %p226, %p227
      %s230 = sadd.s32 %s229, 1
      %p233 = scmp.eq.s32.totalorder %s27, 1
      %p234 = scmp.ne.s32.totalorder %s229, %s231
      %p235 = scmp.eq.s32.totalorder %s27, 0
      %p236 = por %p234, %p235
      %p237 = scmp.ne.s32.totalorder %s229, %s231
      %p238 = scmp.eq.s32.totalorder %s32, 1
      %p239 = por %p237, %p238
      %p240 = scmp.ne.s32.totalorder %s231, %s232
      %p241 = scmp.eq.s32.totalorder %s32, 0
      %p242 = por %p240, %p241
      %p243 = scmp.ne.s32.totalorder %s231, %s232
      %p244 = scmp.eq.s32.totalorder %s33, 1
      %p245 = por %p243, %p244
      %p247 = scmp.ne.s32.totalorder %s232, %s246
      %p248 = scmp.eq.s32.totalorder %s33, 0
      %p249 = por %p247, %p248
      %s250 = ssub.s32 %s27, %s34
      %p251 = scmp.eq.s32.totalorder %s250, 0
      %s253 = sadd.s32 %s252, 1
      %s254 = scalar_select %p251, %s252, %s253
      %p257 = pneg %p251
      %p258 = scmp.eq.s32.totalorder %s27, 1
      %p259 = por %p257, %p258
      %p260 = scmp.ne.s32.totalorder %s252, %s255
      %p261 = scmp.eq.s32.totalorder %s27, 0
      %p262 = por %p260, %p261
      %p263 = scmp.ne.s32.totalorder %s252, %s255
      %p264 = scmp.eq.s32.totalorder %s32, 1
      %p265 = por %p263, %p264
      %p266 = scmp.ne.s32.totalorder %s255, %s256
      %p267 = scmp.eq.s32.totalorder %s32, 0
      %p268 = por %p266, %p267
      %p269 = scmp.ne.s32.totalorder %s255, %s256
      %p270 = scmp.eq.s32.totalorder %s33, 1
      %p271 = por %p269, %p270
      %p273 = scmp.ne.s32.totalorder %s256, %s272
      %p274 = scmp.eq.s32.totalorder %s33, 0
      %p275 = por %p273, %p274
      %p276 = scmp.le.s32.totalorder 1, %s27
      %p277 = scmp.lt.s32.totalorder %s27, 3
      %p278 = pnand %p276, %p277
      %p279 = pneg %p278
      // Predicated region
      $region9: #{tpu_custom_call.1} parent=5 // pred_check
        _
      $region10: #{tpu_custom_call.1} parent=5 // pred_check_branch
        %281 = sbr.rel (%p278) target = $region12
      $region11: #{tpu_custom_call.1} parent=5 // pred_region
        %s282 = ssub.s32 %s27, 1
        // Predicated region
        $region13: #{tpu_custom_call.1} parent=11 // pred_check
          %p283 = pneg %p74
        $region14: #{tpu_custom_call.1} parent=11 // pred_check_branch
          %285 = sbr.rel (%p283) target = $region16
        $region15: #{tpu_custom_call.1} parent=11 // pred_region
          %s287 = ssub.s32 512, 512
          %288 = vsyncadd [#allocation6], %s287
          %s289 = sshll.u32 [#allocation5], 4
          %s290 = int_to_ptr.vmem [resolvable:$true] %s289
          %295 = dma.hbm_to_vmem [thread:$0]  %s1, 512, %s290, [#allocation6], 64, 64, 4
        $region16: #{tpu_custom_call.1} parent=11 // pred_fallthru
          _
        // Predicated region
        $region17: #{tpu_custom_call.1} parent=11 // pred_check
          %p296 = pneg %p95
        $region18: #{tpu_custom_call.1} parent=11 // pred_check_branch
          %298 = sbr.rel (%p296) target = $region20
        $region19: #{tpu_custom_call.1} parent=11 // pred_region
          %s300 = ssub.s32 16, 16
          %301 = vsyncadd [#allocation6], %s300
          %s303 = sshll.u32 [#allocation7], 4
          %s304 = int_to_ptr.vmem [resolvable:$true] %s303
          %306 = dma.hbm_to_vmem [thread:$0]  %s2, 16, %s304, [#allocation6]
        $region20: #{tpu_custom_call.1} parent=11 // pred_fallthru
          _
        // Predicated region
        $region21: #{tpu_custom_call.1} parent=11 // pred_check
          %p307 = pneg %p116
        $region22: #{tpu_custom_call.1} parent=11 // pred_check_branch
          %309 = sbr.rel (%p307) target = $region24
        $region23: #{tpu_custom_call.1} parent=11 // pred_region
          %s311 = ssub.s32 512, 512
          %312 = vsyncadd [#allocation9], %s311
          %s313 = sshll.u32 [#allocation8], 4
          %s314 = int_to_ptr.vmem [resolvable:$true] %s313
          %319 = dma.hbm_to_vmem [thread:$0]  %s3, 512, %s314, [#allocation9], 64, 64, 4
        $region24: #{tpu_custom_call.1} parent=11 // pred_fallthru
          _
        // Predicated region
        $region25: #{tpu_custom_call.1} parent=11 // pred_check
          %p320 = pneg %p137
        $region26: #{tpu_custom_call.1} parent=11 // pred_check_branch
          %322 = sbr.rel (%p320) target = $region28
        $region27: #{tpu_custom_call.1} parent=11 // pred_region
          %s324 = ssub.s32 16, 16
          %325 = vsyncadd [#allocation9], %s324
          %s327 = sshll.u32 [#allocation10], 4
          %s328 = int_to_ptr.vmem [resolvable:$true] %s327
          %330 = dma.hbm_to_vmem [thread:$0]  %s4, 16, %s328, [#allocation9]
        $region28: #{tpu_custom_call.1} parent=11 // pred_fallthru
          _
        // Predicated region
        $region29: #{tpu_custom_call.1} parent=11 // pred_check
          %p331 = pneg %p158
        $region30: #{tpu_custom_call.1} parent=11 // pred_check_branch
          %333 = sbr.rel (%p331) target = $region32
        $region31: #{tpu_custom_call.1} parent=11 // pred_region
          %s335 = ssub.s32 16, 16
          %336 = vsyncadd [#allocation12], %s335
          %s338 = sshll.u32 [#allocation11], 4
          %s339 = int_to_ptr.vmem [resolvable:$true] %s338
          %341 = dma.hbm_to_vmem [thread:$0]  %s5, 16, %s339, [#allocation12]
        $region32: #{tpu_custom_call.1} parent=11 // pred_fallthru
          _
        // Predicated region
        $region33: #{tpu_custom_call.1} parent=11 // pred_check
          %p342 = pneg %p179
        $region34: #{tpu_custom_call.1} parent=11 // pred_check_branch
          %344 = sbr.rel (%p342) target = $region36
        $region35: #{tpu_custom_call.1} parent=11 // pred_region
          %s346 = ssub.s32 1024, 1024
          %347 = vsyncadd [#allocation12], %s346
          %s348 = sshll.u32 [#allocation13], 4
          %s349 = int_to_ptr.vmem [resolvable:$true] %s348
          %354 = dma.hbm_to_vmem [thread:$0]  %s6, 1024, %s349, [#allocation12], 64, 64, 4
        $region36: #{tpu_custom_call.1} parent=11 // pred_fallthru
          _
        // Predicated region
        $region37: #{tpu_custom_call.1} parent=11 // pred_check
          %p355 = pneg %p200
        $region38: #{tpu_custom_call.1} parent=11 // pred_check_branch
          %357 = sbr.rel (%p355) target = $region40
        $region39: #{tpu_custom_call.1} parent=11 // pred_region
          %s359 = ssub.s32 16, 16
          %360 = vsyncadd [#allocation15], %s359
          %s362 = sshll.u32 [#allocation14], 4
          %s363 = int_to_ptr.vmem [resolvable:$true] %s362
          %365 = dma.hbm_to_vmem [thread:$0]  %s7, 16, %s363, [#allocation15]
        $region40: #{tpu_custom_call.1} parent=11 // pred_fallthru
          _
        // Predicated region
        $region41: #{tpu_custom_call.1} parent=11 // pred_check
          %p366 = pneg %p221
        $region42: #{tpu_custom_call.1} parent=11 // pred_check_branch
          %368 = sbr.rel (%p366) target = $region44
        $region43: #{tpu_custom_call.1} parent=11 // pred_region
          %s370 = ssub.s32 1024, 1024
          %371 = vsyncadd [#allocation15], %s370
          %s372 = sshll.u32 [#allocation16], 4
          %s373 = int_to_ptr.vmem [resolvable:$true] %s372
          %378 = dma.hbm_to_vmem [thread:$0]  %s8, 1024, %s373, [#allocation15], 64, 64, 4
        $region44: #{tpu_custom_call.1} parent=11 // pred_fallthru
          _
        // Predicated region
        $region45: #{tpu_custom_call.1} parent=11 // pred_check
          %p379 = pneg %p242
        $region46: #{tpu_custom_call.1} parent=11 // pred_check_branch
          %381 = sbr.rel (%p379) target = $region48
        $region47: #{tpu_custom_call.1} parent=11 // pred_region
          %s383 = ssub.s32 16, 16
          %384 = vsyncadd [#allocation18], %s383
          %s386 = sshll.u32 [#allocation17], 4
          %s387 = int_to_ptr.vmem [resolvable:$true] %s386
          %389 = dma.hbm_to_vmem [thread:$0]  %s9, 16, %s387, [#allocation18]
        $region48: #{tpu_custom_call.1} parent=11 // pred_fallthru
          _
      $region12: #{tpu_custom_call.1} parent=5 // pred_fallthru
        _
      %p390 = scmp.lt.s32.totalorder %s27, 2
      // Predicated region
      $region49: #{tpu_custom_call.1} parent=5 // pred_check
        %p391 = pneg %p390
      $region50: #{tpu_custom_call.1} parent=5 // pred_check_branch
        %393 = sbr.rel (%p391) target = $region52
      $region51: #{tpu_custom_call.1} parent=5 // pred_region
        // Predicated region
        $region53: #{tpu_custom_call.1} parent=51 // pred_check
          %p394 = pneg %p47
        $region54: #{tpu_custom_call.1} parent=51 // pred_check_branch
          %396 = sbr.rel (%p394) target = $region56
        $region55: #{tpu_custom_call.1} parent=51 // pred_region
          %s397 = sand.u32 %s37, 1
          %s398 = scalar_lea.sflag [#allocation3], %s397
          %s399 = sand.u32 %s37, 1
          %s400 = smul.addr %s399, 128
          %s401 = scalar_lea.vmem [#allocation2], %s400
          %s402 = smul.u32 16, %s27
          %s404 = ssub.s32 2048, 2048
          %405 = vsyncadd %s398, %s404
          %s406 = smul.addr %s402, 128
          %s407 = scalar_lea.hbm %s0, %s406
          %s408 = sshll.u32 %s401, 4
          %s409 = int_to_ptr.vmem [resolvable:$true] %s408
          %414 = dma.hbm_to_vmem [thread:$0]  %s407, 2048, %s409, %s398, 128, 128, 8
        $region56: #{tpu_custom_call.1} parent=51 // pred_fallthru
          _
      $region52: #{tpu_custom_call.1} parent=5 // pred_fallthru
        _
      %p415 = scmp.le.s32.totalorder 1, %s27
      %p416 = scmp.lt.s32.totalorder %s27, 3
      %p417 = pnand %p415, %p416
      %p418 = pneg %p417
      // Predicated region
      $region57: #{tpu_custom_call.1} parent=5 // pred_check
        _
      $region58: #{tpu_custom_call.1} parent=5 // pred_check_branch
        %420 = sbr.rel (%p417) target = $region60
      $region59: #{tpu_custom_call.1} parent=5 // pred_region
        %s421 = ssub.s32 %s27, 1
        %s422 = sand.u32 %s40, 1
        %s423 = scalar_lea.sflag [#allocation3], %s422
        %s424 = sand.u32 %s40, 1
        %s425 = smul.addr %s424, 128
        %s426 = scalar_lea.vmem [#allocation2], %s425
        // Predicated region
        $region61: #{tpu_custom_call.1} parent=59 // pred_check
          %p427 = pneg %p53
        $region62: #{tpu_custom_call.1} parent=59 // pred_check_branch
          %429 = sbr.rel (%p427) target = $region64
        $region63: #{tpu_custom_call.1} parent=59 // pred_region
          %430 = dma.done %s423, 2048
        $region64: #{tpu_custom_call.1} parent=59 // pred_fallthru
          _
        // Predicated region
        $region65: #{tpu_custom_call.1} parent=59 // pred_check
          %p431 = pneg %p74
        $region66: #{tpu_custom_call.1} parent=59 // pred_check_branch
          %433 = sbr.rel (%p431) target = $region68
        $region67: #{tpu_custom_call.1} parent=59 // pred_region
          %434 = dma.done [#allocation6], 512
        $region68: #{tpu_custom_call.1} parent=59 // pred_fallthru
          _
        // Predicated region
        $region69: #{tpu_custom_call.1} parent=59 // pred_check
          %p435 = pneg %p95
        $region70: #{tpu_custom_call.1} parent=59 // pred_check_branch
          %437 = sbr.rel (%p435) target = $region72
        $region71: #{tpu_custom_call.1} parent=59 // pred_region
          %438 = dma.done [#allocation6], 16
        $region72: #{tpu_custom_call.1} parent=59 // pred_fallthru
          _
        // Predicated region
        $region73: #{tpu_custom_call.1} parent=59 // pred_check
          %p439 = pneg %p116
        $region74: #{tpu_custom_call.1} parent=59 // pred_check_branch
          %441 = sbr.rel (%p439) target = $region76
        $region75: #{tpu_custom_call.1} parent=59 // pred_region
          %442 = dma.done [#allocation9], 512
        $region76: #{tpu_custom_call.1} parent=59 // pred_fallthru
          _
        // Predicated region
        $region77: #{tpu_custom_call.1} parent=59 // pred_check
          %p443 = pneg %p137
        $region78: #{tpu_custom_call.1} parent=59 // pred_check_branch
          %445 = sbr.rel (%p443) target = $region80
        $region79: #{tpu_custom_call.1} parent=59 // pred_region
          %446 = dma.done [#allocation9], 16
        $region80: #{tpu_custom_call.1} parent=59 // pred_fallthru
          _
        // Predicated region
        $region81: #{tpu_custom_call.1} parent=59 // pred_check
          %p447 = pneg %p158
        $region82: #{tpu_custom_call.1} parent=59 // pred_check_branch
          %449 = sbr.rel (%p447) target = $region84
        $region83: #{tpu_custom_call.1} parent=59 // pred_region
          %450 = dma.done [#allocation12], 16
        $region84: #{tpu_custom_call.1} parent=59 // pred_fallthru
          _
        // Predicated region
        $region85: #{tpu_custom_call.1} parent=59 // pred_check
          %p451 = pneg %p179
        $region86: #{tpu_custom_call.1} parent=59 // pred_check_branch
          %453 = sbr.rel (%p451) target = $region88
        $region87: #{tpu_custom_call.1} parent=59 // pred_region
          %454 = dma.done [#allocation12], 1024
        $region88: #{tpu_custom_call.1} parent=59 // pred_fallthru
          _
        // Predicated region
        $region89: #{tpu_custom_call.1} parent=59 // pred_check
          %p455 = pneg %p200
        $region90: #{tpu_custom_call.1} parent=59 // pred_check_branch
          %457 = sbr.rel (%p455) target = $region92
        $region91: #{tpu_custom_call.1} parent=59 // pred_region
          %458 = dma.done [#allocation15], 16
        $region92: #{tpu_custom_call.1} parent=59 // pred_fallthru
          _
        // Predicated region
        $region93: #{tpu_custom_call.1} parent=59 // pred_check
          %p459 = pneg %p221
        $region94: #{tpu_custom_call.1} parent=59 // pred_check_branch
          %461 = sbr.rel (%p459) target = $region96
        $region95: #{tpu_custom_call.1} parent=59 // pred_region
          %462 = dma.done [#allocation15], 1024
        $region96: #{tpu_custom_call.1} parent=59 // pred_fallthru
          _
        // Predicated region
        $region97: #{tpu_custom_call.1} parent=59 // pred_check
          %p463 = pneg %p242
        $region98: #{tpu_custom_call.1} parent=59 // pred_check_branch
          %465 = sbr.rel (%p463) target = $region100
        $region99: #{tpu_custom_call.1} parent=59 // pred_region
          %466 = dma.done [#allocation18], 16
        $region100: #{tpu_custom_call.1} parent=59 // pred_fallthru
          _
        %s467 = sand.u32 %s40, 1
        %s468 = scalar_lea.sflag [#allocation3], %s467
        %s469 = sand.u32 %s40, 1
        %s470 = smul.addr %s469, 128
        %s471 = scalar_lea.vmem [#allocation2], %s470
        %p472 = pneg %p53
        %p473 = pneg %p50
        %p474 = pneg %p74
        %p475 = pneg %p71
        %p476 = pneg %p95
        %p477 = pneg %p92
        %p478 = pneg %p116
        %p479 = pneg %p113
        %p480 = pneg %p137
        %p481 = pneg %p134
        %p482 = pneg %p158
        %p483 = pneg %p155
        %p484 = pneg %p179
        %p485 = pneg %p176
        %p486 = pneg %p200
        %p487 = pneg %p197
        %p488 = pneg %p221
        %p489 = pneg %p218
        %p490 = pneg %p242
        %p491 = pneg %p239
        %p492 = pneg %p268
        %p493 = pneg %p265
        %s494 = sand.u32 %s255, 1
        %s495 = scalar_lea.sflag [#allocation4], %s494
        %s496 = sand.u32 %s255, 1
        %s497 = smul.addr %s496, 64
        %s498 = scalar_lea.vmem [#allocation19], %s497
        %s499 = smul.u32 16, %s32
        %s500 = smul.u32 16, %s32
        %v502 = vld [vmem:[%s426] sm:$0xff]
        %v503 = vld [vmem:[%s426 + $0x8] sm:$0xff]
        %v504 = vld [vmem:[%s426 + $0x10] sm:$0xff]
        %v505 = vld [vmem:[%s426 + $0x18] sm:$0xff]
        %v506 = vld [vmem:[%s426 + $0x20] sm:$0xff]
        %v507 = vld [vmem:[%s426 + $0x28] sm:$0xff]
        %v508 = vld [vmem:[%s426 + $0x30] sm:$0xff]
        %v509 = vld [vmem:[%s426 + $0x38] sm:$0xff]
        %v510 = vld [vmem:[%s426 + $0x40] sm:$0xff]
        %v511 = vld [vmem:[%s426 + $0x48] sm:$0xff]
        %v512 = vld [vmem:[%s426 + $0x50] sm:$0xff]
        %v513 = vld [vmem:[%s426 + $0x58] sm:$0xff]
        %v514 = vld [vmem:[%s426 + $0x60] sm:$0xff]
        %v515 = vld [vmem:[%s426 + $0x68] sm:$0xff]
        %v516 = vld [vmem:[%s426 + $0x70] sm:$0xff]
        %v517 = vld [vmem:[%s426 + $0x78] sm:$0xff]
        %v518 = vpack.c.bf16 %v503, %v502
        %v519 = vpack.c.bf16 %v505, %v504
        %v520 = vpack.c.bf16 %v507, %v506
        %v521 = vpack.c.bf16 %v509, %v508
        %v522 = vpack.c.bf16 %v511, %v510
        %v523 = vpack.c.bf16 %v513, %v512
        %v524 = vpack.c.bf16 %v515, %v514
        %v525 = vpack.c.bf16 %v517, %v516
        %v526 = vld [vmem:[#allocation5] sm:$0xf]
        %v527 = vld [vmem:[#allocation5 + $0x4] sm:$0xf]
        %v528 = vld [vmem:[#allocation5 + $0x8] sm:$0xf]
        %v529 = vld [vmem:[#allocation5 + $0xc] sm:$0xf]
        %v530 = vld [vmem:[#allocation5 + $0x10] sm:$0xf]
        %v531 = vld [vmem:[#allocation5 + $0x14] sm:$0xf]
        %v532 = vld [vmem:[#allocation5 + $0x18] sm:$0xf]
        %v533 = vld [vmem:[#allocation5 + $0x1c] sm:$0xf]
        %v534 = vld [vmem:[#allocation7] sm:$0x1]
        %v536 = vlaneseq
        %v537 = vshrl.u32 %v536, 7
        %v538 = vsub.s32 0, %v537
        %v539 = vrot.slane %v534, %v538
        %v549 = vunpack.c.l.b16 %v526
        %v550 = vunpack.c.l.b16 %v527
        %v551 = vunpack.c.l.b16 %v528
        %v552 = vunpack.c.l.b16 %v529
        %v553 = vunpack.c.l.b16 %v530
        %v554 = vunpack.c.l.b16 %v531
        %v555 = vunpack.c.l.b16 %v532
        %v556 = vunpack.c.l.b16 %v533
        %v557 = vpack.c.b16 %v550, %v549
        %v558 = vpack.c.b16 %v552, %v551
        %v559 = vpack.c.b16 %v554, %v553
        %v560 = vpack.c.b16 %v556, %v555
        %vm565 = vcmask 523264
        %v567 = vsel %vm565, %v518, 0
        %v570 = vsel %vm565, %v519, 0
        %v573 = vsel %vm565, %v520, 0
        %v576 = vsel %vm565, %v521, 0
        %v579 = vsel %vm565, %v522, 0
        %v582 = vsel %vm565, %v523, 0
        %v585 = vsel %vm565, %v524, 0
        %v588 = vsel %vm565, %v525, 0
        %590 = vmatprep.subr.bf16.mxu0 0
        %591 = vmatpush1.bf16.msra.mxu0 %v557
        %592 = vmatprep.subr.bf16.mxu0 0
        %593 = vmatpush1.bf16.msra.mxu0 %v558
        %594 = vmatprep.subr.bf16.mxu0 0
        %595 = vmatpush1.bf16.msra.mxu0 %v559
        %596 = vmatprep.subr.bf16.mxu0 0
        %597 = vmatpush1.bf16.msra.mxu0 %v560
        %598 = vmatprep.subr.bf16.mxu0 0
        %599 = vmatpush1.bf16.msra.mxu0 0
        %600 = vmatprep.subr.bf16.mxu0 0
        %601 = vmatpush1.bf16.msra.mxu0 0
        %602 = vmatprep.subr.bf16.mxu0 0
        %603 = vmatpush1.bf16.msra.mxu0 0
        %604 = vmatprep.subr.bf16.mxu0 0
        %605 = vmatpush1.bf16.msra.mxu0 0
        %606 = vmatprep.subr.bf16.mxu0 0
        %607 = vmatpush1.bf16.msra.mxu0 0
        %608 = vmatprep.subr.bf16.mxu0 0
        %609 = vmatpush1.bf16.msra.mxu0 0
        %610 = vmatprep.subr.bf16.mxu0 0
        %611 = vmatpush1.bf16.msra.mxu0 0
        %612 = vmatprep.subr.bf16.mxu0 0
        %613 = vmatpush1.bf16.msra.mxu0 0
        %614 = vmatprep.subr.bf16.mxu0 0
        %615 = vmatpush1.bf16.msra.mxu0 0
        %616 = vmatprep.subr.bf16.mxu0 0
        %617 = vmatpush1.bf16.msra.mxu0 0
        %618 = vmatprep.subr.bf16.mxu0 0
        %619 = vmatpush1.bf16.msra.mxu0 0
        %620 = vmatprep.subr.bf16.mxu0 0
        %621 = vmatpush1.bf16.msra.mxu0 0
        %622 = vmatprep.mubr.bf16.mxu0 0
        %623 = vmatmul.mubr.bf16.gmra.mrb[0].mxu0 %v567
        %v624 = vpop.f32.mrb[0].mxu0
        %v625 = vadd.f32 %v539, %v624
        %v626 = vpop.f32.mrb[0].mxu0
        %v627 = vpop.f32.mrb[0].mxu0
        %v628 = vadd.f32 %v539, %v627
        %v629 = vpop.f32.mrb[0].mxu0
        %630 = vmatprep.mubr.bf16.mxu0 0
        %631 = vmatmul.mubr.bf16.gmra.mrb[0].mxu0 %v570
        %v632 = vpop.f32.mrb[0].mxu0
        %v633 = vadd.f32 %v539, %v632
        %v634 = vpop.f32.mrb[0].mxu0
        %v635 = vpop.f32.mrb[0].mxu0
        %v636 = vadd.f32 %v539, %v635
        %v637 = vpop.f32.mrb[0].mxu0
        %638 = vmatprep.mubr.bf16.mxu0 0
        %639 = vmatmul.mubr.bf16.gmra.mrb[0].mxu0 %v573
        %v640 = vpop.f32.mrb[0].mxu0
        %v641 = vadd.f32 %v539, %v640
        %v642 = vpop.f32.mrb[0].mxu0
        %v643 = vpop.f32.mrb[0].mxu0
        %v644 = vadd.f32 %v539, %v643
        %v645 = vpop.f32.mrb[0].mxu0
        %646 = vmatprep.mubr.bf16.mxu0 0
        %647 = vmatmul.mubr.bf16.gmra.mrb[0].mxu0 %v576
        %v648 = vpop.f32.mrb[0].mxu0
        %v649 = vadd.f32 %v539, %v648
        %v650 = vpop.f32.mrb[0].mxu0
        %v651 = vpop.f32.mrb[0].mxu0
        %v652 = vadd.f32 %v539, %v651
        %v653 = vpop.f32.mrb[0].mxu0
        %654 = vmatprep.mubr.bf16.mxu0 0
        %655 = vmatmul.mubr.bf16.gmra.mrb[0].mxu0 %v579
        %v656 = vpop.f32.mrb[0].mxu0
        %v657 = vadd.f32 %v539, %v656
        %v658 = vpop.f32.mrb[0].mxu0
        %v659 = vpop.f32.mrb[0].mxu0
        %v660 = vadd.f32 %v539, %v659
        %v661 = vpop.f32.mrb[0].mxu0
        %662 = vmatprep.mubr.bf16.mxu0 0
        %663 = vmatmul.mubr.bf16.gmra.mrb[0].mxu0 %v582
        %v664 = vpop.f32.mrb[0].mxu0
        %v665 = vadd.f32 %v539, %v664
        %v666 = vpop.f32.mrb[0].mxu0
        %v667 = vpop.f32.mrb[0].mxu0
        %v668 = vadd.f32 %v539, %v667
        %v669 = vpop.f32.mrb[0].mxu0
        %670 = vmatprep.mubr.bf16.mxu0 0
        %671 = vmatmul.mubr.bf16.gmra.mrb[0].mxu0 %v585
        %v672 = vpop.f32.mrb[0].mxu0
        %v673 = vadd.f32 %v539, %v672
        %v674 = vpop.f32.mrb[0].mxu0
        %v675 = vpop.f32.mrb[0].mxu0
        %v676 = vadd.f32 %v539, %v675
        %v677 = vpop.f32.mrb[0].mxu0
        %678 = vmatprep.mubr.bf16.mxu0 0
        %679 = vmatmul.mubr.bf16.gmra.mrb[0].mxu0 %v588
        %v680 = vpop.f32.mrb[0].mxu0
        %v681 = vadd.f32 %v539, %v680
        %v682 = vpop.f32.mrb[0].mxu0
        %v683 = vpop.f32.mrb[0].mxu0
        %v684 = vadd.f32 %v539, %v683
        %v685 = vpop.f32.mrb[0].mxu0
        %686 = vdwg.mxu0
        %v687 = vld [vmem:[#allocation8] sm:$0xf]
        %v688 = vld [vmem:[#allocation8 + $0x4] sm:$0xf]
        %v689 = vld [vmem:[#allocation8 + $0x8] sm:$0xf]
        %v690 = vld [vmem:[#allocation8 + $0xc] sm:$0xf]
        %v691 = vld [vmem:[#allocation8 + $0x10] sm:$0xf]
        %v692 = vld [vmem:[#allocation8 + $0x14] sm:$0xf]
        %v693 = vld [vmem:[#allocation8 + $0x18] sm:$0xf]
        %v694 = vld [vmem:[#allocation8 + $0x1c] sm:$0xf]
        %v695 = vld [vmem:[#allocation10] sm:$0x1]
        %v697 = vlaneseq
        %v698 = vshrl.u32 %v697, 7
        %v699 = vsub.s32 0, %v698
        %v700 = vrot.slane %v695, %v699
        %v710 = vunpack.c.l.b16 %v687
        %v711 = vunpack.c.l.b16 %v688
        %v712 = vunpack.c.l.b16 %v689
        %v713 = vunpack.c.l.b16 %v690
        %v714 = vunpack.c.l.b16 %v691
        %v715 = vunpack.c.l.b16 %v692
        %v716 = vunpack.c.l.b16 %v693
        %v717 = vunpack.c.l.b16 %v694
        %v718 = vpack.c.b16 %v711, %v710
        %v719 = vpack.c.b16 %v713, %v712
        %v720 = vpack.c.b16 %v715, %v714
        %v721 = vpack.c.b16 %v717, %v716
        %726 = vmatprep.subr.bf16.mxu0 0
        %727 = vmatpush1.bf16.msra.mxu0 %v718
        %728 = vmatprep.subr.bf16.mxu0 0
        %729 = vmatpush1.bf16.msra.mxu0 %v719
        %730 = vmatprep.subr.bf16.mxu0 0
        %731 = vmatpush1.bf16.msra.mxu0 %v720
        %732 = vmatprep.subr.bf16.mxu0 0
        %733 = vmatpush1.bf16.msra.mxu0 %v721
        %734 = vmatprep.subr.bf16.mxu0 0
        %735 = vmatpush1.bf16.msra.mxu0 0
        %736 = vmatprep.subr.bf16.mxu0 0
        %737 = vmatpush1.bf16.msra.mxu0 0
        %738 = vmatprep.subr.bf16.mxu0 0
        %739 = vmatpush1.bf16.msra.mxu0 0
        %740 = vmatprep.subr.bf16.mxu0 0
        %741 = vmatpush1.bf16.msra.mxu0 0
        %742 = vmatprep.subr.bf16.mxu0 0
        %743 = vmatpush1.bf16.msra.mxu0 0
        %744 = vmatprep.subr.bf16.mxu0 0
        %745 = vmatpush1.bf16.msra.mxu0 0
        %746 = vmatprep.subr.bf16.mxu0 0
        %747 = vmatpush1.bf16.msra.mxu0 0
        %748 = vmatprep.subr.bf16.mxu0 0
        %749 = vmatpush1.bf16.msra.mxu0 0
        %750 = vmatprep.subr.bf16.mxu0 0
        %751 = vmatpush1.bf16.msra.mxu0 0
        %752 = vmatprep.subr.bf16.mxu0 0
        %753 = vmatpush1.bf16.msra.mxu0 0
        %754 = vmatprep.subr.bf16.mxu0 0
        %755 = vmatpush1.bf16.msra.mxu0 0
        %756 = vmatprep.subr.bf16.mxu0 0
        %757 = vmatpush1.bf16.msra.mxu0 0
        %758 = vmatprep.mubr.bf16.mxu0 0
        %759 = vmatmul.mubr.bf16.gmra.mrb[0].mxu0 %v567
        %v760 = vpop.f32.mrb[0].mxu0
        %v761 = vadd.f32 %v700, %v760
        %v762 = vpop.f32.mrb[0].mxu0
        %v763 = vpop.f32.mrb[0].mxu0
        %v764 = vadd.f32 %v700, %v763
        %v765 = vpop.f32.mrb[0].mxu0
        %766 = vmatprep.mubr.bf16.mxu0 0
        %767 = vmatmul.mubr.bf16.gmra.mrb[0].mxu0 %v570
        %v768 = vpop.f32.mrb[0].mxu0
        %v769 = vadd.f32 %v700, %v768
        %v770 = vpop.f32.mrb[0].mxu0
        %v771 = vpop.f32.mrb[0].mxu0
        %v772 = vadd.f32 %v700, %v771
        %v773 = vpop.f32.mrb[0].mxu0
        %774 = vmatprep.mubr.bf16.mxu0 0
        %775 = vmatmul.mubr.bf16.gmra.mrb[0].mxu0 %v573
        %v776 = vpop.f32.mrb[0].mxu0
        %v777 = vadd.f32 %v700, %v776
        %v778 = vpop.f32.mrb[0].mxu0
        %v779 = vpop.f32.mrb[0].mxu0
        %v780 = vadd.f32 %v700, %v779
        %v781 = vpop.f32.mrb[0].mxu0
        %782 = vmatprep.mubr.bf16.mxu0 0
        %783 = vmatmul.mubr.bf16.gmra.mrb[0].mxu0 %v576
        %v784 = vpop.f32.mrb[0].mxu0
        %v785 = vadd.f32 %v700, %v784
        %v786 = vpop.f32.mrb[0].mxu0
        %v787 = vpop.f32.mrb[0].mxu0
        %v788 = vadd.f32 %v700, %v787
        %v789 = vpop.f32.mrb[0].mxu0
        %790 = vmatprep.mubr.bf16.mxu0 0
        %791 = vmatmul.mubr.bf16.gmra.mrb[0].mxu0 %v579
        %v792 = vpop.f32.mrb[0].mxu0
        %v793 = vadd.f32 %v700, %v792
        %v794 = vpop.f32.mrb[0].mxu0
        %v795 = vpop.f32.mrb[0].mxu0
        %v796 = vadd.f32 %v700, %v795
        %v797 = vpop.f32.mrb[0].mxu0
        %798 = vmatprep.mubr.bf16.mxu0 0
        %799 = vmatmul.mubr.bf16.gmra.mrb[0].mxu0 %v582
        %v800 = vpop.f32.mrb[0].mxu0
        %v801 = vadd.f32 %v700, %v800
        %v802 = vpop.f32.mrb[0].mxu0
        %v803 = vpop.f32.mrb[0].mxu0
        %v804 = vadd.f32 %v700, %v803
        %v805 = vpop.f32.mrb[0].mxu0
        %806 = vmatprep.mubr.bf16.mxu0 0
        %807 = vmatmul.mubr.bf16.gmra.mrb[0].mxu0 %v585
        %v808 = vpop.f32.mrb[0].mxu0
        %v809 = vadd.f32 %v700, %v808
        %v810 = vpop.f32.mrb[0].mxu0
        %v811 = vpop.f32.mrb[0].mxu0
        %v812 = vadd.f32 %v700, %v811
        %v813 = vpop.f32.mrb[0].mxu0
        %814 = vmatprep.mubr.bf16.mxu0 0
        %815 = vmatmul.mubr.bf16.gmra.mrb[0].mxu0 %v588
        %v816 = vpop.f32.mrb[0].mxu0
        %v817 = vadd.f32 %v700, %v816
        %v818 = vpop.f32.mrb[0].mxu0
        %v819 = vpop.f32.mrb[0].mxu0
        %v820 = vadd.f32 %v700, %v819
        %v821 = vpop.f32.mrb[0].mxu0
        %822 = vdwg.mxu0
        %v823 = vmul.f32 %v625, %v625
        %v824 = vmul.f32 %v628, %v628
        %v825 = vmul.f32 %v633, %v633
        %v826 = vmul.f32 %v636, %v636
        %v827 = vmul.f32 %v641, %v641
        %v828 = vmul.f32 %v644, %v644
        %v829 = vmul.f32 %v649, %v649
        %v830 = vmul.f32 %v652, %v652
        %v831 = vmul.f32 %v657, %v657
        %v832 = vmul.f32 %v660, %v660
        %v833 = vmul.f32 %v665, %v665
        %v834 = vmul.f32 %v668, %v668
        %v835 = vmul.f32 %v673, %v673
        %v836 = vmul.f32 %v676, %v676
        %v837 = vmul.f32 %v681, %v681
        %v838 = vmul.f32 %v684, %v684
        %839 = vadd.xlane.f32.xlu0 %v823
        %v840 = vpop.xlane.xlu0 %839
        %841 = vadd.xlane.f32.xlu0 %v824
        %v842 = vpop.xlane.xlu0 %841
        %843 = vadd.xlane.f32.xlu0 %v825
        %v844 = vpop.xlane.xlu0 %843
        %845 = vadd.xlane.f32.xlu0 %v826
        %v846 = vpop.xlane.xlu0 %845
        %847 = vadd.xlane.f32.xlu0 %v827
        %v848 = vpop.xlane.xlu0 %847
        %849 = vadd.xlane.f32.xlu0 %v828
        %v850 = vpop.xlane.xlu0 %849
        %851 = vadd.xlane.f32.xlu0 %v829
        %v852 = vpop.xlane.xlu0 %851
        %853 = vadd.xlane.f32.xlu0 %v830
        %v854 = vpop.xlane.xlu0 %853
        %855 = vadd.xlane.f32.xlu0 %v831
        %v856 = vpop.xlane.xlu0 %855
        %857 = vadd.xlane.f32.xlu0 %v832
        %v858 = vpop.xlane.xlu0 %857
        %859 = vadd.xlane.f32.xlu0 %v833
        %v860 = vpop.xlane.xlu0 %859
        %861 = vadd.xlane.f32.xlu0 %v834
        %v862 = vpop.xlane.xlu0 %861
        %863 = vadd.xlane.f32.xlu0 %v835
        %v864 = vpop.xlane.xlu0 %863
        %865 = vadd.xlane.f32.xlu0 %v836
        %v866 = vpop.xlane.xlu0 %865
        %867 = vadd.xlane.f32.xlu0 %v837
        %v868 = vpop.xlane.xlu0 %867
        %869 = vadd.xlane.f32.xlu0 %v838
        %v870 = vpop.xlane.xlu0 %869
        %v871 = vmax.f32 %v840, 1e-24
        %v872 = vmax.f32 %v842, 1e-24
        %v873 = vmax.f32 %v844, 1e-24
        %v874 = vmax.f32 %v846, 1e-24
        %v875 = vmax.f32 %v848, 1e-24
        %v876 = vmax.f32 %v850, 1e-24
        %v877 = vmax.f32 %v852, 1e-24
        %v878 = vmax.f32 %v854, 1e-24
        %v879 = vmax.f32 %v856, 1e-24
        %v880 = vmax.f32 %v858, 1e-24
        %v881 = vmax.f32 %v860, 1e-24
        %v882 = vmax.f32 %v862, 1e-24
        %v883 = vmax.f32 %v864, 1e-24
        %v884 = vmax.f32 %v866, 1e-24
        %v885 = vmax.f32 %v868, 1e-24
        %v886 = vmax.f32 %v870, 1e-24
        %v887 = vrsqrt.pop %v871
        %v888 = vrsqrt.pop %v872
        %v889 = vrsqrt.pop %v873
        %v890 = vrsqrt.pop %v874
        %v891 = vrsqrt.pop %v875
        %v892 = vrsqrt.pop %v876
        %v893 = vrsqrt.pop %v877
        %v894 = vrsqrt.pop %v878
        %v895 = vrsqrt.pop %v879
        %v896 = vrsqrt.pop %v880
        %v897 = vrsqrt.pop %v881
        %v898 = vrsqrt.pop %v882
        %v899 = vrsqrt.pop %v883
        %v900 = vrsqrt.pop %v884
        %v901 = vrsqrt.pop %v885
        %v902 = vrsqrt.pop %v886
        %v903 = vmul.f32 %v625, %v887
        %v904 = vmul.f32 %v628, %v888
        %v905 = vmul.f32 %v633, %v889
        %v906 = vmul.f32 %v636, %v890
        %v907 = vmul.f32 %v641, %v891
        %v908 = vmul.f32 %v644, %v892
        %v909 = vmul.f32 %v649, %v893
        %v910 = vmul.f32 %v652, %v894
        %v911 = vmul.f32 %v657, %v895
        %v912 = vmul.f32 %v660, %v896
        %v913 = vmul.f32 %v665, %v897
        %v914 = vmul.f32 %v668, %v898
        %v915 = vmul.f32 %v673, %v899
        %v916 = vmul.f32 %v676, %v900
        %v917 = vmul.f32 %v681, %v901
        %v918 = vmul.f32 %v684, %v902
        %v919 = vmul.f32 %v761, %v761
        %v920 = vmul.f32 %v764, %v764
        %v921 = vmul.f32 %v769, %v769
        %v922 = vmul.f32 %v772, %v772
        %v923 = vmul.f32 %v777, %v777
        %v924 = vmul.f32 %v780, %v780
        %v925 = vmul.f32 %v785, %v785
        %v926 = vmul.f32 %v788, %v788
        %v927 = vmul.f32 %v793, %v793
        %v928 = vmul.f32 %v796, %v796
        %v929 = vmul.f32 %v801, %v801
        %v930 = vmul.f32 %v804, %v804
        %v931 = vmul.f32 %v809, %v809
        %v932 = vmul.f32 %v812, %v812
        %v933 = vmul.f32 %v817, %v817
        %v934 = vmul.f32 %v820, %v820
        %935 = vadd.xlane.f32.xlu0 %v919
        %v936 = vpop.xlane.xlu0 %935
        %937 = vadd.xlane.f32.xlu0 %v920
        %v938 = vpop.xlane.xlu0 %937
        %939 = vadd.xlane.f32.xlu0 %v921
        %v940 = vpop.xlane.xlu0 %939
        %941 = vadd.xlane.f32.xlu0 %v922
        %v942 = vpop.xlane.xlu0 %941
        %943 = vadd.xlane.f32.xlu0 %v923
        %v944 = vpop.xlane.xlu0 %943
        %945 = vadd.xlane.f32.xlu0 %v924
        %v946 = vpop.xlane.xlu0 %945
        %947 = vadd.xlane.f32.xlu0 %v925
        %v948 = vpop.xlane.xlu0 %947
        %949 = vadd.xlane.f32.xlu0 %v926
        %v950 = vpop.xlane.xlu0 %949
        %951 = vadd.xlane.f32.xlu0 %v927
        %v952 = vpop.xlane.xlu0 %951
        %953 = vadd.xlane.f32.xlu0 %v928
        %v954 = vpop.xlane.xlu0 %953
        %955 = vadd.xlane.f32.xlu0 %v929
        %v956 = vpop.xlane.xlu0 %955
        %957 = vadd.xlane.f32.xlu0 %v930
        %v958 = vpop.xlane.xlu0 %957
        %959 = vadd.xlane.f32.xlu0 %v931
        %v960 = vpop.xlane.xlu0 %959
        %961 = vadd.xlane.f32.xlu0 %v932
        %v962 = vpop.xlane.xlu0 %961
        %963 = vadd.xlane.f32.xlu0 %v933
        %v964 = vpop.xlane.xlu0 %963
        %965 = vadd.xlane.f32.xlu0 %v934
        %v966 = vpop.xlane.xlu0 %965
        %v967 = vmax.f32 %v936, 1e-24
        %v968 = vmax.f32 %v938, 1e-24
        %v969 = vmax.f32 %v940, 1e-24
        %v970 = vmax.f32 %v942, 1e-24
        %v971 = vmax.f32 %v944, 1e-24
        %v972 = vmax.f32 %v946, 1e-24
        %v973 = vmax.f32 %v948, 1e-24
        %v974 = vmax.f32 %v950, 1e-24
        %v975 = vmax.f32 %v952, 1e-24
        %v976 = vmax.f32 %v954, 1e-24
        %v977 = vmax.f32 %v956, 1e-24
        %v978 = vmax.f32 %v958, 1e-24
        %v979 = vmax.f32 %v960, 1e-24
        %v980 = vmax.f32 %v962, 1e-24
        %v981 = vmax.f32 %v964, 1e-24
        %v982 = vmax.f32 %v966, 1e-24
        %v983 = vrsqrt.pop %v967
        %v984 = vrsqrt.pop %v968
        %v985 = vrsqrt.pop %v969
        %v986 = vrsqrt.pop %v970
        %v987 = vrsqrt.pop %v971
        %v988 = vrsqrt.pop %v972
        %v989 = vrsqrt.pop %v973
        %v990 = vrsqrt.pop %v974
        %v991 = vrsqrt.pop %v975
        %v992 = vrsqrt.pop %v976
        %v993 = vrsqrt.pop %v977
        %v994 = vrsqrt.pop %v978
        %v995 = vrsqrt.pop %v979
        %v996 = vrsqrt.pop %v980
        %v997 = vrsqrt.pop %v981
        %v998 = vrsqrt.pop %v982
        %v999 = vmul.f32 %v761, %v983
        %v1000 = vmul.f32 %v764, %v984
        %v1001 = vmul.f32 %v769, %v985
        %v1002 = vmul.f32 %v772, %v986
        %v1003 = vmul.f32 %v777, %v987
        %v1004 = vmul.f32 %v780, %v988
        %v1005 = vmul.f32 %v785, %v989
        %v1006 = vmul.f32 %v788, %v990
        %v1007 = vmul.f32 %v793, %v991
        %v1008 = vmul.f32 %v796, %v992
        %v1009 = vmul.f32 %v801, %v993
        %v1010 = vmul.f32 %v804, %v994
        %v1011 = vmul.f32 %v809, %v995
        %v1012 = vmul.f32 %v812, %v996
        %v1013 = vmul.f32 %v817, %v997
        %v1014 = vmul.f32 %v820, %v998
        %v1015 = vld [vmem:[#allocation11] sm:$0x1]
        %v1017 = vlaneseq
        %v1018 = vshrl.u32 %v1017, 7
        %v1019 = vsub.s32 0, %v1018
        %v1020 = vrot.slane %v1015, %v1019
        %v1022 = vmul.f32 %v903, %v1020
        %v1023 = vmul.f32 %v904, %v1020
        %v1024 = vmul.f32 %v905, %v1020
        %v1025 = vmul.f32 %v906, %v1020
        %v1026 = vmul.f32 %v907, %v1020
        %v1027 = vmul.f32 %v908, %v1020
        %v1028 = vmul.f32 %v909, %v1020
        %v1029 = vmul.f32 %v910, %v1020
        %v1030 = vmul.f32 %v911, %v1020
        %v1031 = vmul.f32 %v912, %v1020
        %v1032 = vmul.f32 %v913, %v1020
        %v1033 = vmul.f32 %v914, %v1020
        %v1034 = vmul.f32 %v915, %v1020
        %v1035 = vmul.f32 %v916, %v1020
        %v1036 = vmul.f32 %v917, %v1020
        %v1037 = vmul.f32 %v918, %v1020
        %1038 = vadd.xlane.f32.xlu0 %v1022
        %v1039 = vpop.xlane.xlu0 %1038
        %1040 = vadd.xlane.f32.xlu0 %v1023
        %v1041 = vpop.xlane.xlu0 %1040
        %1042 = vadd.xlane.f32.xlu0 %v1024
        %v1043 = vpop.xlane.xlu0 %1042
        %1044 = vadd.xlane.f32.xlu0 %v1025
        %v1045 = vpop.xlane.xlu0 %1044
        %1046 = vadd.xlane.f32.xlu0 %v1026
        %v1047 = vpop.xlane.xlu0 %1046
        %1048 = vadd.xlane.f32.xlu0 %v1027
        %v1049 = vpop.xlane.xlu0 %1048
        %1050 = vadd.xlane.f32.xlu0 %v1028
        %v1051 = vpop.xlane.xlu0 %1050
        %1052 = vadd.xlane.f32.xlu0 %v1029
        %v1053 = vpop.xlane.xlu0 %1052
        %1054 = vadd.xlane.f32.xlu0 %v1030
        %v1055 = vpop.xlane.xlu0 %1054
        %1056 = vadd.xlane.f32.xlu0 %v1031
        %v1057 = vpop.xlane.xlu0 %1056
        %1058 = vadd.xlane.f32.xlu0 %v1032
        %v1059 = vpop.xlane.xlu0 %1058
        %1060 = vadd.xlane.f32.xlu0 %v1033
        %v1061 = vpop.xlane.xlu0 %1060
        %1062 = vadd.xlane.f32.xlu0 %v1034
        %v1063 = vpop.xlane.xlu0 %1062
        %1064 = vadd.xlane.f32.xlu0 %v1035
        %v1065 = vpop.xlane.xlu0 %1064
        %1066 = vadd.xlane.f32.xlu0 %v1036
        %v1067 = vpop.xlane.xlu0 %1066
        %1068 = vadd.xlane.f32.xlu0 %v1037
        %v1069 = vpop.xlane.xlu0 %1068
        %v1070 = vmul.f32 %v1039, %v1039
        %v1071 = vmul.f32 %v1041, %v1041
        %v1072 = vmul.f32 %v1043, %v1043
        %v1073 = vmul.f32 %v1045, %v1045
        %v1074 = vmul.f32 %v1047, %v1047
        %v1075 = vmul.f32 %v1049, %v1049
        %v1076 = vmul.f32 %v1051, %v1051
        %v1077 = vmul.f32 %v1053, %v1053
        %v1078 = vmul.f32 %v1055, %v1055
        %v1079 = vmul.f32 %v1057, %v1057
        %v1080 = vmul.f32 %v1059, %v1059
        %v1081 = vmul.f32 %v1061, %v1061
        %v1082 = vmul.f32 %v1063, %v1063
        %v1083 = vmul.f32 %v1065, %v1065
        %v1084 = vmul.f32 %v1067, %v1067
        %v1085 = vmul.f32 %v1069, %v1069
        %v1086 = vadd.f32 %v1070, %v1071
        %v1087 = vadd.f32 %v1086, %v1072
        %v1088 = vadd.f32 %v1087, %v1073
        %v1089 = vadd.f32 %v1088, %v1074
        %v1090 = vadd.f32 %v1089, %v1075
        %v1091 = vadd.f32 %v1090, %v1076
        %v1092 = vadd.f32 %v1091, %v1077
        %v1093 = vadd.f32 %v1078, %v1079
        %v1094 = vadd.f32 %v1093, %v1080
        %v1095 = vadd.f32 %v1094, %v1081
        %v1096 = vadd.f32 %v1095, %v1082
        %v1097 = vadd.f32 %v1096, %v1083
        %v1098 = vadd.f32 %v1097, %v1084
        %v1099 = vadd.f32 %v1098, %v1085
        %v1100 = vmax.f32 %v1092, 1e-24
        %v1101 = vmax.f32 %v1099, 1e-24
        %v1102 = vrsqrt.pop %v1100
        %v1103 = vrsqrt.pop %v1101
        %v1104 = vmul.f32 %v1039, %v1102
        %v1105 = vmul.f32 %v1041, %v1102
        %v1106 = vmul.f32 %v1043, %v1102
        %v1107 = vmul.f32 %v1045, %v1102
        %v1108 = vmul.f32 %v1047, %v1102
        %v1109 = vmul.f32 %v1049, %v1102
        %v1110 = vmul.f32 %v1051, %v1102
        %v1111 = vmul.f32 %v1053, %v1102
        %v1112 = vmul.f32 %v1055, %v1103
        %v1113 = vmul.f32 %v1057, %v1103
        %v1114 = vmul.f32 %v1059, %v1103
        %v1115 = vmul.f32 %v1061, %v1103
        %v1116 = vmul.f32 %v1063, %v1103
        %v1117 = vmul.f32 %v1065, %v1103
        %v1118 = vmul.f32 %v1067, %v1103
        %v1119 = vmul.f32 %v1069, %v1103
        %v1120 = vmul.f32 %v1104, %v903
        %v1121 = vmul.f32 %v1105, %v904
        %v1122 = vmul.f32 %v1106, %v905
        %v1123 = vmul.f32 %v1107, %v906
        %v1124 = vmul.f32 %v1108, %v907
        %v1125 = vmul.f32 %v1109, %v908
        %v1126 = vmul.f32 %v1110, %v909
        %v1127 = vmul.f32 %v1111, %v910
        %v1128 = vmul.f32 %v1112, %v911
        %v1129 = vmul.f32 %v1113, %v912
        %v1130 = vmul.f32 %v1114, %v913
        %v1131 = vmul.f32 %v1115, %v914
        %v1132 = vmul.f32 %v1116, %v915
        %v1133 = vmul.f32 %v1117, %v916
        %v1134 = vmul.f32 %v1118, %v917
        %v1135 = vmul.f32 %v1119, %v918
        %v1136 = vadd.f32 %v1120, %v1121
        %v1137 = vadd.f32 %v1136, %v1122
        %v1138 = vadd.f32 %v1137, %v1123
        %v1139 = vadd.f32 %v1138, %v1124
        %v1140 = vadd.f32 %v1139, %v1125
        %v1141 = vadd.f32 %v1140, %v1126
        %v1142 = vadd.f32 %v1141, %v1127
        %v1143 = vadd.f32 %v1128, %v1129
        %v1144 = vadd.f32 %v1143, %v1130
        %v1145 = vadd.f32 %v1144, %v1131
        %v1146 = vadd.f32 %v1145, %v1132
        %v1147 = vadd.f32 %v1146, %v1133
        %v1148 = vadd.f32 %v1147, %v1134
        %v1149 = vadd.f32 %v1148, %v1135
        %v1150 = vmul.f32 %v1142, %v999
        %v1151 = vmul.f32 %v1142, %v1000
        %v1152 = vmul.f32 %v1142, %v1001
        %v1153 = vmul.f32 %v1142, %v1002
        %v1154 = vmul.f32 %v1142, %v1003
        %v1155 = vmul.f32 %v1142, %v1004
        %v1156 = vmul.f32 %v1142, %v1005
        %v1157 = vmul.f32 %v1142, %v1006
        %v1158 = vmul.f32 %v1149, %v1007
        %v1159 = vmul.f32 %v1149, %v1008
        %v1160 = vmul.f32 %v1149, %v1009
        %v1161 = vmul.f32 %v1149, %v1010
        %v1162 = vmul.f32 %v1149, %v1011
        %v1163 = vmul.f32 %v1149, %v1012
        %v1164 = vmul.f32 %v1149, %v1013
        %v1165 = vmul.f32 %v1149, %v1014
        %v1166 = vpack.c.bf16 %v1151, %v1150
        %v1167 = vpack.c.bf16 %v1153, %v1152
        %v1168 = vpack.c.bf16 %v1155, %v1154
        %v1169 = vpack.c.bf16 %v1157, %v1156
        %v1170 = vpack.c.bf16 %v1159, %v1158
        %v1171 = vpack.c.bf16 %v1161, %v1160
        %v1172 = vpack.c.bf16 %v1163, %v1162
        %v1173 = vpack.c.bf16 %v1165, %v1164
        %v1174 = vld [vmem:[#allocation13] sm:$0xf]
        %v1175 = vld [vmem:[#allocation13 + $0x4] sm:$0xf]
        %v1176 = vld [vmem:[#allocation13 + $0x8] sm:$0xf]
        %v1177 = vld [vmem:[#allocation13 + $0xc] sm:$0xf]
        %v1178 = vld [vmem:[#allocation13 + $0x10] sm:$0xf]
        %v1179 = vld [vmem:[#allocation13 + $0x14] sm:$0xf]
        %v1180 = vld [vmem:[#allocation13 + $0x18] sm:$0xf]
        %v1181 = vld [vmem:[#allocation13 + $0x1c] sm:$0xf]
        %v1182 = vld [vmem:[#allocation13 + $0x20] sm:$0xf]
        %v1183 = vld [vmem:[#allocation13 + $0x24] sm:$0xf]
        %v1184 = vld [vmem:[#allocation13 + $0x28] sm:$0xf]
        %v1185 = vld [vmem:[#allocation13 + $0x2c] sm:$0xf]
        %v1186 = vld [vmem:[#allocation13 + $0x30] sm:$0xf]
        %v1187 = vld [vmem:[#allocation13 + $0x34] sm:$0xf]
        %v1188 = vld [vmem:[#allocation13 + $0x38] sm:$0xf]
        %v1189 = vld [vmem:[#allocation13 + $0x3c] sm:$0xf]
        %v1190 = vld [vmem:[#allocation14] sm:$0x1]
        %v1192 = vlaneseq
        %v1193 = vshrl.u32 %v1192, 7
        %v1194 = vsub.s32 0, %v1193
        %v1195 = vrot.slane %v1190, %v1194
        %v1213 = vunpack.c.l.b16 %v1174
        %v1214 = vunpack.c.l.b16 %v1175
        %v1215 = vunpack.c.l.b16 %v1176
        %v1216 = vunpack.c.l.b16 %v1177
        %v1217 = vunpack.c.l.b16 %v1178
        %v1218 = vunpack.c.l.b16 %v1179
        %v1219 = vunpack.c.l.b16 %v1180
        %v1220 = vunpack.c.l.b16 %v1181
        %v1221 = vunpack.c.l.b16 %v1182
        %v1222 = vunpack.c.l.b16 %v1183
        %v1223 = vunpack.c.l.b16 %v1184
        %v1224 = vunpack.c.l.b16 %v1185
        %v1225 = vunpack.c.l.b16 %v1186
        %v1226 = vunpack.c.l.b16 %v1187
        %v1227 = vunpack.c.l.b16 %v1188
        %v1228 = vunpack.c.l.b16 %v1189
        %v1229 = vpack.c.b16 %v1214, %v1213
        %v1230 = vpack.c.b16 %v1216, %v1215
        %v1231 = vpack.c.b16 %v1218, %v1217
        %v1232 = vpack.c.b16 %v1220, %v1219
        %v1233 = vpack.c.b16 %v1222, %v1221
        %v1234 = vpack.c.b16 %v1224, %v1223
        %v1235 = vpack.c.b16 %v1226, %v1225
        %v1236 = vpack.c.b16 %v1228, %v1227
        %1245 = vmatprep.subr.bf16.mxu0 0
        %1246 = vmatpush1.bf16.msra.mxu0 %v1229
        %1247 = vmatprep.subr.bf16.mxu0 0
        %1248 = vmatpush1.bf16.msra.mxu0 %v1230
        %1249 = vmatprep.subr.bf16.mxu0 0
        %1250 = vmatpush1.bf16.msra.mxu0 %v1231
        %1251 = vmatprep.subr.bf16.mxu0 0
        %1252 = vmatpush1.bf16.msra.mxu0 %v1232
        %1253 = vmatprep.subr.bf16.mxu0 0
        %1254 = vmatpush1.bf16.msra.mxu0 %v1233
        %1255 = vmatprep.subr.bf16.mxu0 0
        %1256 = vmatpush1.bf16.msra.mxu0 %v1234
        %1257 = vmatprep.subr.bf16.mxu0 0
        %1258 = vmatpush1.bf16.msra.mxu0 %v1235
        %1259 = vmatprep.subr.bf16.mxu0 0
        %1260 = vmatpush1.bf16.msra.mxu0 %v1236
        %1261 = vmatprep.subr.bf16.mxu0 0
        %1262 = vmatpush1.bf16.msra.mxu0 0
        %1263 = vmatprep.subr.bf16.mxu0 0
        %1264 = vmatpush1.bf16.msra.mxu0 0
        %1265 = vmatprep.subr.bf16.mxu0 0
        %1266 = vmatpush1.bf16.msra.mxu0 0
        %1267 = vmatprep.subr.bf16.mxu0 0
        %1268 = vmatpush1.bf16.msra.mxu0 0
        %1269 = vmatprep.subr.bf16.mxu0 0
        %1270 = vmatpush1.bf16.msra.mxu0 0
        %1271 = vmatprep.subr.bf16.mxu0 0
        %1272 = vmatpush1.bf16.msra.mxu0 0
        %1273 = vmatprep.subr.bf16.mxu0 0
        %1274 = vmatpush1.bf16.msra.mxu0 0
        %1275 = vmatprep.subr.bf16.mxu0 0
        %1276 = vmatpush1.bf16.msra.mxu0 0
        %1277 = vmatprep.mubr.bf16.mxu0 0
        %1278 = vmatmul.mubr.bf16.gmra.mrb[0].mxu0 %v1166
        %v1279 = vpop.f32.mrb[0].mxu0
        %v1280 = vadd.f32 %v1195, %v1279
        %v1281 = vpop.f32.mrb[0].mxu0
        %v1282 = vpop.f32.mrb[0].mxu0
        %v1283 = vadd.f32 %v1195, %v1282
        %v1284 = vpop.f32.mrb[0].mxu0
        %1285 = vmatprep.mubr.bf16.mxu0 0
        %1286 = vmatmul.mubr.bf16.gmra.mrb[0].mxu0 %v1167
        %v1287 = vpop.f32.mrb[0].mxu0
        %v1288 = vadd.f32 %v1195, %v1287
        %v1289 = vpop.f32.mrb[0].mxu0
        %v1290 = vpop.f32.mrb[0].mxu0
        %v1291 = vadd.f32 %v1195, %v1290
        %v1292 = vpop.f32.mrb[0].mxu0
        %1293 = vmatprep.mubr.bf16.mxu0 0
        %1294 = vmatmul.mubr.bf16.gmra.mrb[0].mxu0 %v1168
        %v1295 = vpop.f32.mrb[0].mxu0
        %v1296 = vadd.f32 %v1195, %v1295
        %v1297 = vpop.f32.mrb[0].mxu0
        %v1298 = vpop.f32.mrb[0].mxu0
        %v1299 = vadd.f32 %v1195, %v1298
        %v1300 = vpop.f32.mrb[0].mxu0
        %1301 = vmatprep.mubr.bf16.mxu0 0
        %1302 = vmatmul.mubr.bf16.gmra.mrb[0].mxu0 %v1169
        %v1303 = vpop.f32.mrb[0].mxu0
        %v1304 = vadd.f32 %v1195, %v1303
        %v1305 = vpop.f32.mrb[0].mxu0
        %v1306 = vpop.f32.mrb[0].mxu0
        %v1307 = vadd.f32 %v1195, %v1306
        %v1308 = vpop.f32.mrb[0].mxu0
        %1309 = vmatprep.mubr.bf16.mxu0 0
        %1310 = vmatmul.mubr.bf16.gmra.mrb[0].mxu0 %v1170
        %v1311 = vpop.f32.mrb[0].mxu0
        %v1312 = vadd.f32 %v1195, %v1311
        %v1313 = vpop.f32.mrb[0].mxu0
        %v1314 = vpop.f32.mrb[0].mxu0
        %v1315 = vadd.f32 %v1195, %v1314
        %v1316 = vpop.f32.mrb[0].mxu0
        %1317 = vmatprep.mubr.bf16.mxu0 0
        %1318 = vmatmul.mubr.bf16.gmra.mrb[0].mxu0 %v1171
        %v1319 = vpop.f32.mrb[0].mxu0
        %v1320 = vadd.f32 %v1195, %v1319
        %v1321 = vpop.f32.mrb[0].mxu0
        %v1322 = vpop.f32.mrb[0].mxu0
        %v1323 = vadd.f32 %v1195, %v1322
        %v1324 = vpop.f32.mrb[0].mxu0
        %1325 = vmatprep.mubr.bf16.mxu0 0
        %1326 = vmatmul.mubr.bf16.gmra.mrb[0].mxu0 %v1172
        %v1327 = vpop.f32.mrb[0].mxu0
        %v1328 = vadd.f32 %v1195, %v1327
        %v1329 = vpop.f32.mrb[0].mxu0
        %v1330 = vpop.f32.mrb[0].mxu0
        %v1331 = vadd.f32 %v1195, %v1330
        %v1332 = vpop.f32.mrb[0].mxu0
        %1333 = vmatprep.mubr.bf16.mxu0 0
        %1334 = vmatmul.mubr.bf16.gmra.mrb[0].mxu0 %v1173
        %v1335 = vpop.f32.mrb[0].mxu0
        %v1336 = vadd.f32 %v1195, %v1335
        %v1337 = vpop.f32.mrb[0].mxu0
        %v1338 = vpop.f32.mrb[0].mxu0
        %v1339 = vadd.f32 %v1195, %v1338
        %v1340 = vpop.f32.mrb[0].mxu0
        %1341 = vdwg.mxu0
        %v1342 = vadd.f32 %v1280, %v903
        %v1343 = vadd.f32 %v1283, %v904
        %v1344 = vadd.f32 %v1288, %v905
        %v1345 = vadd.f32 %v1291, %v906
        %v1346 = vadd.f32 %v1296, %v907
        %v1347 = vadd.f32 %v1299, %v908
        %v1348 = vadd.f32 %v1304, %v909
        %v1349 = vadd.f32 %v1307, %v910
        %v1350 = vadd.f32 %v1312, %v911
        %v1351 = vadd.f32 %v1315, %v912
        %v1352 = vadd.f32 %v1320, %v913
        %v1353 = vadd.f32 %v1323, %v914
        %v1354 = vadd.f32 %v1328, %v915
        %v1355 = vadd.f32 %v1331, %v916
        %v1356 = vadd.f32 %v1336, %v917
        %v1357 = vadd.f32 %v1339, %v918
        %v1358 = vpack.c.bf16 %v1343, %v1342
        %v1359 = vpack.c.bf16 %v1345, %v1344
        %v1360 = vpack.c.bf16 %v1347, %v1346
        %v1361 = vpack.c.bf16 %v1349, %v1348
        %v1362 = vpack.c.bf16 %v1351, %v1350
        %v1363 = vpack.c.bf16 %v1353, %v1352
        %v1364 = vpack.c.bf16 %v1355, %v1354
        %v1365 = vpack.c.bf16 %v1357, %v1356
        %v1366 = vld [vmem:[#allocation16] sm:$0xf]
        %v1367 = vld [vmem:[#allocation16 + $0x4] sm:$0xf]
        %v1368 = vld [vmem:[#allocation16 + $0x8] sm:$0xf]
        %v1369 = vld [vmem:[#allocation16 + $0xc] sm:$0xf]
        %v1370 = vld [vmem:[#allocation16 + $0x10] sm:$0xf]
        %v1371 = vld [vmem:[#allocation16 + $0x14] sm:$0xf]
        %v1372 = vld [vmem:[#allocation16 + $0x18] sm:$0xf]
        %v1373 = vld [vmem:[#allocation16 + $0x1c] sm:$0xf]
        %v1374 = vld [vmem:[#allocation16 + $0x20] sm:$0xf]
        %v1375 = vld [vmem:[#allocation16 + $0x24] sm:$0xf]
        %v1376 = vld [vmem:[#allocation16 + $0x28] sm:$0xf]
        %v1377 = vld [vmem:[#allocation16 + $0x2c] sm:$0xf]
        %v1378 = vld [vmem:[#allocation16 + $0x30] sm:$0xf]
        %v1379 = vld [vmem:[#allocation16 + $0x34] sm:$0xf]
        %v1380 = vld [vmem:[#allocation16 + $0x38] sm:$0xf]
        %v1381 = vld [vmem:[#allocation16 + $0x3c] sm:$0xf]
        %v1382 = vld [vmem:[#allocation17] sm:$0x1]
        %v1384 = vlaneseq
        %v1385 = vshrl.u32 %v1384, 7
        %v1386 = vsub.s32 0, %v1385
        %v1387 = vrot.slane %v1382, %v1386
        %v1405 = vunpack.c.l.b16 %v1366
        %v1406 = vunpack.c.l.b16 %v1367
        %v1407 = vunpack.c.l.b16 %v1368
        %v1408 = vunpack.c.l.b16 %v1369
        %v1409 = vunpack.c.l.b16 %v1370
        %v1410 = vunpack.c.l.b16 %v1371
        %v1411 = vunpack.c.l.b16 %v1372
        %v1412 = vunpack.c.l.b16 %v1373
        %v1413 = vunpack.c.l.b16 %v1374
        %v1414 = vunpack.c.l.b16 %v1375
        %v1415 = vunpack.c.l.b16 %v1376
        %v1416 = vunpack.c.l.b16 %v1377
        %v1417 = vunpack.c.l.b16 %v1378
        %v1418 = vunpack.c.l.b16 %v1379
        %v1419 = vunpack.c.l.b16 %v1380
        %v1420 = vunpack.c.l.b16 %v1381
        %v1421 = vpack.c.b16 %v1406, %v1405
        %v1422 = vpack.c.b16 %v1408, %v1407
        %v1423 = vpack.c.b16 %v1410, %v1409
        %v1424 = vpack.c.b16 %v1412, %v1411
        %v1425 = vpack.c.b16 %v1414, %v1413
        %v1426 = vpack.c.b16 %v1416, %v1415
        %v1427 = vpack.c.b16 %v1418, %v1417
        %v1428 = vpack.c.b16 %v1420, %v1419
        %1437 = vmatprep.subr.bf16.mxu0 0
        %1438 = vmatpush1.bf16.msra.mxu0 %v1421
        %1439 = vmatprep.subr.bf16.mxu0 0
        %1440 = vmatpush1.bf16.msra.mxu0 %v1422
        %1441 = vmatprep.subr.bf16.mxu0 0
        %1442 = vmatpush1.bf16.msra.mxu0 %v1423
        %1443 = vmatprep.subr.bf16.mxu0 0
        %1444 = vmatpush1.bf16.msra.mxu0 %v1424
        %1445 = vmatprep.subr.bf16.mxu0 0
        %1446 = vmatpush1.bf16.msra.mxu0 %v1425
        %1447 = vmatprep.subr.bf16.mxu0 0
        %1448 = vmatpush1.bf16.msra.mxu0 %v1426
        %1449 = vmatprep.subr.bf16.mxu0 0
        %1450 = vmatpush1.bf16.msra.mxu0 %v1427
        %1451 = vmatprep.subr.bf16.mxu0 0
        %1452 = vmatpush1.bf16.msra.mxu0 %v1428
        %1453 = vmatprep.subr.bf16.mxu0 0
        %1454 = vmatpush1.bf16.msra.mxu0 0
        %1455 = vmatprep.subr.bf16.mxu0 0
        %1456 = vmatpush1.bf16.msra.mxu0 0
        %1457 = vmatprep.subr.bf16.mxu0 0
        %1458 = vmatpush1.bf16.msra.mxu0 0
        %1459 = vmatprep.subr.bf16.mxu0 0
        %1460 = vmatpush1.bf16.msra.mxu0 0
        %1461 = vmatprep.subr.bf16.mxu0 0
        %1462 = vmatpush1.bf16.msra.mxu0 0
        %1463 = vmatprep.subr.bf16.mxu0 0
        %1464 = vmatpush1.bf16.msra.mxu0 0
        %1465 = vmatprep.subr.bf16.mxu0 0
        %1466 = vmatpush1.bf16.msra.mxu0 0
        %1467 = vmatprep.subr.bf16.mxu0 0
        %1468 = vmatpush1.bf16.msra.mxu0 0
        %1469 = vmatprep.mubr.bf16.mxu0 0
        %1470 = vmatmul.mubr.bf16.gmra.mrb[0].mxu0 %v1358
        %v1471 = vpop.f32.mrb[0].mxu0
        %v1472 = vadd.f32 %v1387, %v1471
        %v1473 = vpop.f32.mrb[0].mxu0
        %v1474 = vpop.f32.mrb[0].mxu0
        %v1475 = vadd.f32 %v1387, %v1474
        %v1476 = vpop.f32.mrb[0].mxu0
        %1477 = vmatprep.mubr.bf16.mxu0 0
        %1478 = vmatmul.mubr.bf16.gmra.mrb[0].mxu0 %v1359
        %v1479 = vpop.f32.mrb[0].mxu0
        %v1480 = vadd.f32 %v1387, %v1479
        %v1481 = vpop.f32.mrb[0].mxu0
        %v1482 = vpop.f32.mrb[0].mxu0
        %v1483 = vadd.f32 %v1387, %v1482
        %v1484 = vpop.f32.mrb[0].mxu0
        %1485 = vmatprep.mubr.bf16.mxu0 0
        %1486 = vmatmul.mubr.bf16.gmra.mrb[0].mxu0 %v1360
        %v1487 = vpop.f32.mrb[0].mxu0
        %v1488 = vadd.f32 %v1387, %v1487
        %v1489 = vpop.f32.mrb[0].mxu0
        %v1490 = vpop.f32.mrb[0].mxu0
        %v1491 = vadd.f32 %v1387, %v1490
        %v1492 = vpop.f32.mrb[0].mxu0
        %1493 = vmatprep.mubr.bf16.mxu0 0
        %1494 = vmatmul.mubr.bf16.gmra.mrb[0].mxu0 %v1361
        %v1495 = vpop.f32.mrb[0].mxu0
        %v1496 = vadd.f32 %v1387, %v1495
        %v1497 = vpop.f32.mrb[0].mxu0
        %v1498 = vpop.f32.mrb[0].mxu0
        %v1499 = vadd.f32 %v1387, %v1498
        %v1500 = vpop.f32.mrb[0].mxu0
        %1501 = vmatprep.mubr.bf16.mxu0 0
        %1502 = vmatmul.mubr.bf16.gmra.mrb[0].mxu0 %v1362
        %v1503 = vpop.f32.mrb[0].mxu0
        %v1504 = vadd.f32 %v1387, %v1503
        %v1505 = vpop.f32.mrb[0].mxu0
        %v1506 = vpop.f32.mrb[0].mxu0
        %v1507 = vadd.f32 %v1387, %v1506
        %v1508 = vpop.f32.mrb[0].mxu0
        %1509 = vmatprep.mubr.bf16.mxu0 0
        %1510 = vmatmul.mubr.bf16.gmra.mrb[0].mxu0 %v1363
        %v1511 = vpop.f32.mrb[0].mxu0
        %v1512 = vadd.f32 %v1387, %v1511
        %v1513 = vpop.f32.mrb[0].mxu0
        %v1514 = vpop.f32.mrb[0].mxu0
        %v1515 = vadd.f32 %v1387, %v1514
        %v1516 = vpop.f32.mrb[0].mxu0
        %1517 = vmatprep.mubr.bf16.mxu0 0
        %1518 = vmatmul.mubr.bf16.gmra.mrb[0].mxu0 %v1364
        %v1519 = vpop.f32.mrb[0].mxu0
        %v1520 = vadd.f32 %v1387, %v1519
        %v1521 = vpop.f32.mrb[0].mxu0
        %v1522 = vpop.f32.mrb[0].mxu0
        %v1523 = vadd.f32 %v1387, %v1522
        %v1524 = vpop.f32.mrb[0].mxu0
        %1525 = vmatprep.mubr.bf16.mxu0 0
        %1526 = vmatmul.mubr.bf16.gmra.mrb[0].mxu0 %v1365
        %v1527 = vpop.f32.mrb[0].mxu0
        %v1528 = vadd.f32 %v1387, %v1527
        %v1529 = vpop.f32.mrb[0].mxu0
        %v1530 = vpop.f32.mrb[0].mxu0
        %v1531 = vadd.f32 %v1387, %v1530
        %v1532 = vpop.f32.mrb[0].mxu0
        %1533 = vdwg.mxu0
        %v1534 = vpack.c.bf16 %v1475, %v1472
        %v1535 = vpack.c.bf16 %v1483, %v1480
        %v1536 = vpack.c.bf16 %v1491, %v1488
        %v1537 = vpack.c.bf16 %v1499, %v1496
        %v1538 = vpack.c.bf16 %v1507, %v1504
        %v1539 = vpack.c.bf16 %v1515, %v1512
        %v1540 = vpack.c.bf16 %v1523, %v1520
        %v1541 = vpack.c.bf16 %v1531, %v1528
        %v1550 = vunpack.c.l.b16 %v1534
        %v1551 = vunpack.c.h.b16 %v1534
        %v1552 = vunpack.c.l.b16 %v1535
        %v1553 = vunpack.c.h.b16 %v1535
        %v1554 = vunpack.c.l.b16 %v1536
        %v1555 = vunpack.c.h.b16 %v1536
        %v1556 = vunpack.c.l.b16 %v1537
        %v1557 = vunpack.c.h.b16 %v1537
        %v1558 = vunpack.c.l.b16 %v1538
        %v1559 = vunpack.c.h.b16 %v1538
        %v1560 = vunpack.c.l.b16 %v1539
        %v1561 = vunpack.c.h.b16 %v1539
        %v1562 = vunpack.c.l.b16 %v1540
        %v1563 = vunpack.c.h.b16 %v1540
        %v1564 = vunpack.c.l.b16 %v1541
        %v1565 = vunpack.c.h.b16 %v1541
        %v1566 = vpack.c.b16 %v1550, %v1550
        %v1567 = vpack.c.b16 %v1551, %v1551
        %v1568 = vpack.c.b16 %v1552, %v1552
        %v1569 = vpack.c.b16 %v1553, %v1553
        %v1570 = vpack.c.b16 %v1554, %v1554
        %v1571 = vpack.c.b16 %v1555, %v1555
        %v1572 = vpack.c.b16 %v1556, %v1556
        %v1573 = vpack.c.b16 %v1557, %v1557
        %v1574 = vpack.c.b16 %v1558, %v1558
        %v1575 = vpack.c.b16 %v1559, %v1559
        %v1576 = vpack.c.b16 %v1560, %v1560
        %v1577 = vpack.c.b16 %v1561, %v1561
        %v1578 = vpack.c.b16 %v1562, %v1562
        %v1579 = vpack.c.b16 %v1563, %v1563
        %v1580 = vpack.c.b16 %v1564, %v1564
        %v1581 = vpack.c.b16 %v1565, %v1565
        %vm1598 = vcmask 519168
        %1599 = vst.msk [vmem:[%s498] sm:$0xf] %vm1598, %v1566
        %1600 = vst.msk [vmem:[%s498 + $0x4] sm:$0xf] %vm1598, %v1567
        %1601 = vst.msk [vmem:[%s498 + $0x8] sm:$0xf] %vm1598, %v1568
        %1602 = vst.msk [vmem:[%s498 + $0xc] sm:$0xf] %vm1598, %v1569
        %1603 = vst.msk [vmem:[%s498 + $0x10] sm:$0xf] %vm1598, %v1570
        %1604 = vst.msk [vmem:[%s498 + $0x14] sm:$0xf] %vm1598, %v1571
        %1605 = vst.msk [vmem:[%s498 + $0x18] sm:$0xf] %vm1598, %v1572
        %1606 = vst.msk [vmem:[%s498 + $0x1c] sm:$0xf] %vm1598, %v1573
        %1607 = vst.msk [vmem:[%s498 + $0x20] sm:$0xf] %vm1598, %v1574
        %1608 = vst.msk [vmem:[%s498 + $0x24] sm:$0xf] %vm1598, %v1575
        %1609 = vst.msk [vmem:[%s498 + $0x28] sm:$0xf] %vm1598, %v1576
        %1610 = vst.msk [vmem:[%s498 + $0x2c] sm:$0xf] %vm1598, %v1577
        %1611 = vst.msk [vmem:[%s498 + $0x30] sm:$0xf] %vm1598, %v1578
        %1612 = vst.msk [vmem:[%s498 + $0x34] sm:$0xf] %vm1598, %v1579
        %1613 = vst.msk [vmem:[%s498 + $0x38] sm:$0xf] %vm1598, %v1580
        %1614 = vst.msk [vmem:[%s498 + $0x3c] sm:$0xf] %vm1598, %v1581
        %s1615 = sand.u32 %s255, 1
        %s1616 = scalar_lea.sflag [#allocation4], %s1615
        %s1617 = sand.u32 %s255, 1
        %s1618 = smul.addr %s1617, 64
        %s1619 = scalar_lea.vmem [#allocation19], %s1618
        // Predicated region
        $region101: #{tpu_custom_call.1} parent=59 // pred_check
          %p1620 = pneg %p265
        $region102: #{tpu_custom_call.1} parent=59 // pred_check_branch
          %1622 = sbr.rel (%p1620) target = $region104
        $region103: #{tpu_custom_call.1} parent=59 // pred_region
          %s1623 = smul.u32 16, %s32
          %s1625 = ssub.s32 1024, 1024
          %1626 = vsyncadd %s1616, %s1625
          %s1627 = smul.addr %s1623, 64
          %s1628 = scalar_lea.hbm %s10, %s1627
          %s1629 = sshll.u32 %s1619, 4
          %s1630 = int_to_ptr.vmem [resolvable:$true] %s1629
          %1635 = dma.vmem_to_hbm [thread:$0]  %s1630, 1024, %s1628, %s1616, 64, 64, 4
        $region104: #{tpu_custom_call.1} parent=59 // pred_fallthru
          _
      $region60: #{tpu_custom_call.1} parent=5 // pred_fallthru
        _
      %p1636 = scmp.le.s32.totalorder 2, %s27
      // Predicated region
      $region105: #{tpu_custom_call.1} parent=5 // pred_check
        %p1637 = pneg %p1636
      $region106: #{tpu_custom_call.1} parent=5 // pred_check_branch
        %1639 = sbr.rel (%p1637) target = $region108
      $region107: #{tpu_custom_call.1} parent=5 // pred_region
        %s1640 = ssub.s32 %s27, 2
        // Predicated region
        $region109: #{tpu_custom_call.1} parent=107 // pred_check
          %p1641 = pneg %p271
        $region110: #{tpu_custom_call.1} parent=107 // pred_check_branch
          %1643 = sbr.rel (%p1641) target = $region112
        $region111: #{tpu_custom_call.1} parent=107 // pred_region
          %s1644 = sand.u32 %s256, 1
          %s1645 = scalar_lea.sflag [#allocation4], %s1644
          %s1646 = sand.u32 %s256, 1
          %s1647 = smul.addr %s1646, 64
          %s1648 = scalar_lea.vmem [#allocation19], %s1647
          %1649 = dma.done %s1645, 1024
        $region112: #{tpu_custom_call.1} parent=107 // pred_fallthru
          _
      $region108: #{tpu_custom_call.1} parent=5 // pred_fallthru
        _
    $region6: #{tpu_custom_call.1} parent=1 // loop_footer
      %s31 = sadd.s32 1, %s27
    $region7: #{tpu_custom_call.1} parent=1 // loop_footer_branch
      %26 = sbr.rel target = $region3
    $region8: #{tpu_custom_call.1} parent=1 // loop_exit
      _
    %1650 = vsyncpa [#allocation3], 1
    %s1651 = scalar_lea.sflag [#allocation3], 1
    %1652 = vsyncpa %s1651, 1
    %1653 = vsyncpa [#allocation6], 1
    %1654 = vsyncpa [#allocation9], 1
    %1655 = vsyncpa [#allocation12], 1
    %1656 = vsyncpa [#allocation15], 1
    %1657 = vsyncpa [#allocation18], 1
    %1658 = vsyncpa [#allocation4], 1
    %s1659 = scalar_lea.sflag [#allocation4], 1
    %1660 = vsyncpa %s1659, 1

</llo_original>
